<compile_context>
chip_gen: v7x
topology: tpu7x:2x2x1
jax: 0.10.0
libtpu: 0.0.40
codegen_flags: <defaults>
</compile_context>

<pallas_src>
import functools

import jax
import jax.numpy as jnp
from jax.experimental import pallas as pl
from jax.experimental.pallas import tpu as pltpu


def _fuse_kernel(xs_ref, xf_ref, w_ref, b_ref, o_ref, *,
                 kT, alpha, pad, T_f, T_out, HW, C_slow, C_out):
    # xs_ref : (1, C_slow, T_out*HW)       slow pathway (pass-through, fused concat)
    # xf_ref : (1, C_in,  T_f*HW)          fast pathway, native NCTHW memory
    # w_ref  : (kT, C_out, C_in)           BN-scale-folded conv weight (f32)
    # b_ref  : (C_out, 1)                  folded BN bias (f32)
    # o_ref  : (1, C_slow+C_out, T_out*HW) concat([x_s, relu(bn(conv(x_f)))], C)

    # ---- fused concat: slow-pathway channels are a straight VMEM copy.
    o_ref[0, 0:C_slow, :] = xs_ref[0].astype(o_ref.dtype)

    # ---- hoisted load / broadcast (outside the unrolled time loop).
    w = w_ref[...]                                              # (kT, C_out, C_in)
    bias = jnp.broadcast_to(b_ref[...], (C_out, HW))            # (C_out, HW), f32

    # ---- temporal conv (stride alpha, zero time padding) + BN bias + ReLU.
    # Static unroll: T_out is small for SlowFast lateral fusion.  Out-of-range
    # taps are skipped statically == zero padding contributes nothing.
    for t in range(T_out):
        acc = bias                                              # f32 accumulator
        for k in range(kT):
            tt = t * alpha - pad + k                            # input frame index
            if 0 <= tt < T_f:
                tap = xf_ref[0, :, tt * HW:(tt + 1) * HW]       # (C_in, HW), static slice
                acc = acc + jnp.dot(w[k], tap,
                                    preferred_element_type=jnp.float32)
        y = jnp.maximum(acc, 0.0)                               # BN bias already in acc
        o_ref[0, C_slow:C_slow + C_out, t * HW:(t + 1) * HW] = y.astype(o_ref.dtype)


def fuse_fast_to_slow(x_s, x_f, weight, gamma, beta, running_mean, running_var,
                      *, fusion_kernel, alpha, eps=1e-5, out_dtype=None):
    """Returns [x_s_fuse, x_f], matching FuseFastToSlow.forward (eval-mode BN)."""
    N, C_in, T_f, H, W = x_f.shape
    Ns, C_slow, T_slow, Hs, Ws = x_s.shape
    C_out = weight.shape[0]
    kT = fusion_kernel
    pad = kT // 2
    T_out = (T_f + 2 * pad - kT) // alpha + 1
    HW = H * W
    C_tot = C_slow + C_out
    if out_dtype is None:
        out_dtype = x_s.dtype

    # torch.cat([x_s, fuse], dim=1) requires matching (N, T, H, W).
    assert (Ns, T_slow, Hs, Ws) == (N, T_out, H, W), (
        "fused concat requires x_s spatio-temporal dims to match the conv output")

    # ---- fold eval-mode BN into the conv (all in f32):
    #      w' = w * scale,  b' = beta - mean * scale
    scale = gamma / jnp.sqrt(running_var + eps)                          # (C_out,)
    bias = (beta - running_mean * scale).reshape(C_out, 1).astype(jnp.float32)
    # (C_out, C_in, kT, 1, 1) -> (kT, C_out, C_in), BN-scaled.
    w = (weight[..., 0, 0] * scale[:, None, None]).transpose(2, 0, 1)
    w = w.astype(jnp.float32)

    # ---- FREE reshapes of contiguous NCTHW memory (no pad/transpose/cast pass).
    xf_flat = x_f.reshape(N, C_in, T_f * HW)
    xs_flat = x_s.reshape(N, C_slow, T_out * HW)

    kernel = functools.partial(
        _fuse_kernel, kT=kT, alpha=alpha, pad=pad, T_f=T_f, T_out=T_out,
        HW=HW, C_slow=C_slow, C_out=C_out)

    out = pl.pallas_call(
        kernel,
        out_shape=jax.ShapeDtypeStruct((N, C_tot, T_out * HW), out_dtype),
        grid_spec=pltpu.PrefetchScalarGridSpec(
            num_scalar_prefetch=0,
            grid=(N,),                                           # one sample per step
            in_specs=[
                pl.BlockSpec((1, C_slow, T_out * HW), lambda n: (n, 0, 0)),
                pl.BlockSpec((1, C_in, T_f * HW), lambda n: (n, 0, 0)),
                pl.BlockSpec((kT, C_out, C_in), lambda n: (0, 0, 0)),   # resident
                pl.BlockSpec((C_out, 1), lambda n: (0, 0)),             # resident
            ],
            out_specs=pl.BlockSpec((1, C_tot, T_out * HW), lambda n: (n, 0, 0)),
        ),
        compiler_params=pltpu.CompilerParams(
            dimension_semantics=("parallel",),
            # Tiny per-step blocks here; re-derive against 64 MiB (v7x) and/or
            # split HW for 56x56 stages.
            vmem_limit_bytes=32 * 1024 * 1024),
    )(xs_flat, xf_flat, w, bias)

    # Kernel wrote NC(T*H*W) == NCTHW memory directly; only a free reshape left.
    x_s_fuse = out.reshape(N, C_tot, T_out, H, W)
    return [x_s_fuse, x_f]


def _reference(x_s, x_f, weight, gamma, beta, rmean, rvar, *, fusion_kernel, alpha, eps):
    pad = fusion_kernel // 2
    fuse = jax.lax.conv_general_dilated(
        x_f, weight,
        window_strides=(alpha, 1, 1),
        padding=((pad, pad), (0, 0), (0, 0)),
        dimension_numbers=("NCDHW", "OIDHW", "NCDHW"))
    scale = (gamma / jnp.sqrt(rvar + eps))[None, :, None, None, None]
    shift = (beta - rmean * gamma / jnp.sqrt(rvar + eps))[None, :, None, None, None]
    fuse = jnp.maximum(fuse * scale + shift, 0.0)
    return [jnp.concatenate([x_s, fuse], axis=1), x_f]


if __name__ == "__main__":
    # Module hyper-params (synthetic, small).
    dim_in = 4                       # fast-pathway channels
    fusion_conv_channel_ratio = 2    # C_out = 8
    fusion_kernel = 5
    alpha = 4
    eps = 1e-5

    N = 2
    T_fast = 16
    T_slow = T_fast // alpha         # 4
    H = W = 16
    C_slow = 16

    key = jax.random.PRNGKey(0)
    k1, k2, k3, k4, k5, k6, k7 = jax.random.split(key, 7)

    x_s = jax.random.normal(k1, (N, C_slow, T_slow, H, W), jnp.float32)
    x_f = jax.random.normal(k2, (N, dim_in, T_fast, H, W), jnp.float32)

    C_out = dim_in * fusion_conv_channel_ratio
    weight = 0.1 * jax.random.normal(k3, (C_out, dim_in, fusion_kernel, 1, 1), jnp.float32)
    gamma = 1.0 + 0.1 * jax.random.normal(k4, (C_out,), jnp.float32)
    beta = 0.1 * jax.random.normal(k5, (C_out,), jnp.float32)
    running_mean = 0.1 * jax.random.normal(k6, (C_out,), jnp.float32)
    running_var = 1.0 + 0.1 * jax.random.uniform(k7, (C_out,), jnp.float32)

    ref_s, ref_f = _reference(x_s, x_f, weight, gamma, beta, running_mean, running_var,
                              fusion_kernel=fusion_kernel, alpha=alpha, eps=eps)

    run = jax.jit(functools.partial(
        fuse_fast_to_slow, fusion_kernel=fusion_kernel, alpha=alpha, eps=eps))
    out_s, out_f = run(x_s, x_f, weight, gamma, beta, running_mean, running_var)
    jax.block_until_ready(out_s)
    jax.block_until_ready(out_f)

    assert out_s.shape == (N, C_slow + C_out, T_slow, H, W)
    assert out_f.shape == x_f.shape
    assert jnp.allclose(out_s, ref_s, rtol=1e-5, atol=1e-5), \
        f"max abs err = {float(jnp.max(jnp.abs(out_s - ref_s)))}"
    assert jnp.allclose(out_f, ref_f)

    # TODO(synk): training-mode BatchNorm (running-stat update) is not implemented;
    # the module is instantiated with train=False so eval-mode BN is folded.
    print("KERNEL_OK")
</pallas_src>

<mosaic_0001>
module attributes {stable_mosaic.version = 11 : i64} {
  func.func @_fuse_kernel(%arg0: i32, %arg1: memref<1x16x1024xf32, #tpu.memory_space<vmem>>, %arg2: memref<1x4x4096xf32, #tpu.memory_space<vmem>>, %arg3: memref<5x8x4xf32, #tpu.memory_space<vmem>>, %arg4: memref<8x1xf32, #tpu.memory_space<vmem>>, %arg5: memref<1x24x1024xf32, #tpu.memory_space<vmem>>) attributes {dimension_semantics = [#tpu.dimension_semantics<parallel>], iteration_bounds = array<i64: 2>, scalar_prefetch = 0 : i64, scratch_operands = 0 : i64, tpu.core_type = #tpu.core_type<tc>, window_params = [{transform_indices = @transform_0, window_bounds = array<i64: 1, 16, 1024>}, {transform_indices = @transform_1, window_bounds = array<i64: 1, 4, 4096>}, {pipeline_mode = #tpu.pipeline_mode<synchronous>, transform_indices = @transform_2, window_bounds = array<i64: 5, 8, 4>}, {pipeline_mode = #tpu.pipeline_mode<synchronous>, transform_indices = @transform_3, window_bounds = array<i64: 8, 1>}, {transform_indices = @transform_4, window_bounds = array<i64: 1, 24, 1024>}]} {
    %c0 = arith.constant 0 : index
    %c0_0 = arith.constant 0 : index
    %c0_1 = arith.constant 0 : index
    %0 = vector.load %arg1[%c0, %c0_0, %c0_1] : memref<1x16x1024xf32, #tpu.memory_space<vmem>>, vector<1x16x1024xf32>
    %1 = vector.shape_cast %0 : vector<1x16x1024xf32> to vector<16x1024xf32>
    %c0_2 = arith.constant 0 : index
    %c0_3 = arith.constant 0 : index
    %c0_4 = arith.constant 0 : index
    %2 = vector.load %arg5[%c0_2, %c0_3, %c0_4] : memref<1x24x1024xf32, #tpu.memory_space<vmem>>, vector<1x16x1024xf32>
    %3 = vector.shape_cast %2 : vector<1x16x1024xf32> to vector<16x1024xf32>
    %4 = vector.shape_cast %1 : vector<16x1024xf32> to vector<1x16x1024xf32>
    tpu.vector_store %arg5[%c0_2, %c0_3, %c0_4], %4 {strides = array<i32>} : memref<1x24x1024xf32, #tpu.memory_space<vmem>>, vector<1x16x1024xf32>,
    %c0_5 = arith.constant 0 : index
    %c0_6 = arith.constant 0 : index
    %c0_7 = arith.constant 0 : index
    %5 = vector.load %arg3[%c0_5, %c0_6, %c0_7] : memref<5x8x4xf32, #tpu.memory_space<vmem>>, vector<5x8x4xf32>
    %c0_8 = arith.constant 0 : index
    %c0_9 = arith.constant 0 : index
    %6 = vector.load %arg4[%c0_8, %c0_9] : memref<8x1xf32, #tpu.memory_space<vmem>>, vector<8x1xf32>
    %7 = vector.shape_cast %6 : vector<8x1xf32> to vector<8x1xf32>
    %8 = vector.broadcast %7 : vector<8x1xf32> to vector<8x256xf32>
    %c0_10 = arith.constant 0 : index
    %c0_11 = arith.constant 0 : index
    %c0_12 = arith.constant 0 : index
    %9 = vector.load %arg2[%c0_10, %c0_11, %c0_12] : memref<1x4x4096xf32, #tpu.memory_space<vmem>>, vector<1x4x256xf32>
    %10 = vector.shape_cast %9 : vector<1x4x256xf32> to vector<4x256xf32>
    %11 = vector.extract_strided_slice %5 {offsets = [2, 0, 0], sizes = [1, 8, 4], strides = [1, 1, 1]} : vector<5x8x4xf32> to vector<1x8x4xf32>
    %12 = vector.shape_cast %11 : vector<1x8x4xf32> to vector<8x4xf32>
    %cst = arith.constant dense<0.000000e+00> : vector<8x256xf32>
    %13 = tpu.matmul %12, %10, %cst {dimension_numbers = #tpu.dot_dimension_numbers<[1], [0], [0], [1], [0, 0, 1, 1], [], []>} : vector<8x4xf32>, vector<4x256xf32>, vector<8x256xf32> -> vector<8x256xf32>
    %14 = arith.addf %8, %13 : vector<8x256xf32>
    %c0_13 = arith.constant 0 : index
    %c0_14 = arith.constant 0 : index
    %c256 = arith.constant 256 : index
    %15 = vector.load %arg2[%c0_13, %c0_14, %c256] : memref<1x4x4096xf32, #tpu.memory_space<vmem>>, vector<1x4x256xf32>
    %16 = vector.shape_cast %15 : vector<1x4x256xf32> to vector<4x256xf32>
    %17 = vector.extract_strided_slice %5 {offsets = [3, 0, 0], sizes = [1, 8, 4], strides = [1, 1, 1]} : vector<5x8x4xf32> to vector<1x8x4xf32>
    %18 = vector.shape_cast %17 : vector<1x8x4xf32> to vector<8x4xf32>
    %cst_15 = arith.constant dense<0.000000e+00> : vector<8x256xf32>
    %19 = tpu.matmul %18, %16, %cst_15 {dimension_numbers = #tpu.dot_dimension_numbers<[1], [0], [0], [1], [0, 0, 1, 1], [], []>} : vector<8x4xf32>, vector<4x256xf32>, vector<8x256xf32> -> vector<8x256xf32>
    %20 = arith.addf %14, %19 : vector<8x256xf32>
    %c0_16 = arith.constant 0 : index
    %c0_17 = arith.constant 0 : index
    %c512 = arith.constant 512 : index
    %21 = vector.load %arg2[%c0_16, %c0_17, %c512] : memref<1x4x4096xf32, #tpu.memory_space<vmem>>, vector<1x4x256xf32>
    %22 = vector.shape_cast %21 : vector<1x4x256xf32> to vector<4x256xf32>
    %23 = vector.extract_strided_slice %5 {offsets = [4, 0, 0], sizes = [1, 8, 4], strides = [1, 1, 1]} : vector<5x8x4xf32> to vector<1x8x4xf32>
    %24 = vector.shape_cast %23 : vector<1x8x4xf32> to vector<8x4xf32>
    %cst_18 = arith.constant dense<0.000000e+00> : vector<8x256xf32>
    %25 = tpu.matmul %24, %22, %cst_18 {dimension_numbers = #tpu.dot_dimension_numbers<[1], [0], [0], [1], [0, 0, 1, 1], [], []>} : vector<8x4xf32>, vector<4x256xf32>, vector<8x256xf32> -> vector<8x256xf32>
    %26 = arith.addf %20, %25 : vector<8x256xf32>
    %cst_19 = arith.constant 0.000000e+00 : f32
    %27 = vector.broadcast %cst_19 : f32 to vector<8x256xf32>
    %28 = arith.maximumf %26, %27 : vector<8x256xf32>
    %c0_20 = arith.constant 0 : index
    %c16 = arith.constant 16 : index
    %c0_21 = arith.constant 0 : index
    %29 = vector.load %arg5[%c0_20, %c16, %c0_21] : memref<1x24x1024xf32, #tpu.memory_space<vmem>>, vector<1x8x256xf32>
    %30 = vector.shape_cast %29 : vector<1x8x256xf32> to vector<8x256xf32>
    %31 = vector.shape_cast %28 : vector<8x256xf32> to vector<1x8x256xf32>
    tpu.vector_store %arg5[%c0_20, %c16, %c0_21], %31 {strides = array<i32>} : memref<1x24x1024xf32, #tpu.memory_space<vmem>>, vector<1x8x256xf32>,
    %c0_22 = arith.constant 0 : index
    %c0_23 = arith.constant 0 : index
    %c512_24 = arith.constant 512 : index
    %32 = vector.load %arg2[%c0_22, %c0_23, %c512_24] : memref<1x4x4096xf32, #tpu.memory_space<vmem>>, vector<1x4x256xf32>
    %33 = vector.shape_cast %32 : vector<1x4x256xf32> to vector<4x256xf32>
    %34 = vector.extract_strided_slice %5 {offsets = [0, 0, 0], sizes = [1, 8, 4], strides = [1, 1, 1]} : vector<5x8x4xf32> to vector<1x8x4xf32>
    %35 = vector.shape_cast %34 : vector<1x8x4xf32> to vector<8x4xf32>
    %cst_25 = arith.constant dense<0.000000e+00> : vector<8x256xf32>
    %36 = tpu.matmul %35, %33, %cst_25 {dimension_numbers = #tpu.dot_dimension_numbers<[1], [0], [0], [1], [0, 0, 1, 1], [], []>} : vector<8x4xf32>, vector<4x256xf32>, vector<8x256xf32> -> vector<8x256xf32>
    %37 = arith.addf %8, %36 : vector<8x256xf32>
    %c0_26 = arith.constant 0 : index
    %c0_27 = arith.constant 0 : index
    %c768 = arith.constant 768 : index
    %38 = vector.load %arg2[%c0_26, %c0_27, %c768] : memref<1x4x4096xf32, #tpu.memory_space<vmem>>, vector<1x4x256xf32>
    %39 = vector.shape_cast %38 : vector<1x4x256xf32> to vector<4x256xf32>
    %40 = vector.extract_strided_slice %5 {offsets = [1, 0, 0], sizes = [1, 8, 4], strides = [1, 1, 1]} : vector<5x8x4xf32> to vector<1x8x4xf32>
    %41 = vector.shape_cast %40 : vector<1x8x4xf32> to vector<8x4xf32>
    %cst_28 = arith.constant dense<0.000000e+00> : vector<8x256xf32>
    %42 = tpu.matmul %41, %39, %cst_28 {dimension_numbers = #tpu.dot_dimension_numbers<[1], [0], [0], [1], [0, 0, 1, 1], [], []>} : vector<8x4xf32>, vector<4x256xf32>, vector<8x256xf32> -> vector<8x256xf32>
    %43 = arith.addf %37, %42 : vector<8x256xf32>
    %c0_29 = arith.constant 0 : index
    %c0_30 = arith.constant 0 : index
    %c1024 = arith.constant 1024 : index
    %44 = vector.load %arg2[%c0_29, %c0_30, %c1024] : memref<1x4x4096xf32, #tpu.memory_space<vmem>>, vector<1x4x256xf32>
    %45 = vector.shape_cast %44 : vector<1x4x256xf32> to vector<4x256xf32>
    %46 = vector.extract_strided_slice %5 {offsets = [2, 0, 0], sizes = [1, 8, 4], strides = [1, 1, 1]} : vector<5x8x4xf32> to vector<1x8x4xf32>
    %47 = vector.shape_cast %46 : vector<1x8x4xf32> to vector<8x4xf32>
    %cst_31 = arith.constant dense<0.000000e+00> : vector<8x256xf32>
    %48 = tpu.matmul %47, %45, %cst_31 {dimension_numbers = #tpu.dot_dimension_numbers<[1], [0], [0], [1], [0, 0, 1, 1], [], []>} : vector<8x4xf32>, vector<4x256xf32>, vector<8x256xf32> -> vector<8x256xf32>
    %49 = arith.addf %43, %48 : vector<8x256xf32>
    %c0_32 = arith.constant 0 : index
    %c0_33 = arith.constant 0 : index
    %c1280 = arith.constant 1280 : index
    %50 = vector.load %arg2[%c0_32, %c0_33, %c1280] : memref<1x4x4096xf32, #tpu.memory_space<vmem>>, vector<1x4x256xf32>
    %51 = vector.shape_cast %50 : vector<1x4x256xf32> to vector<4x256xf32>
    %52 = vector.extract_strided_slice %5 {offsets = [3, 0, 0], sizes = [1, 8, 4], strides = [1, 1, 1]} : vector<5x8x4xf32> to vector<1x8x4xf32>
    %53 = vector.shape_cast %52 : vector<1x8x4xf32> to vector<8x4xf32>
    %cst_34 = arith.constant dense<0.000000e+00> : vector<8x256xf32>
    %54 = tpu.matmul %53, %51, %cst_34 {dimension_numbers = #tpu.dot_dimension_numbers<[1], [0], [0], [1], [0, 0, 1, 1], [], []>} : vector<8x4xf32>, vector<4x256xf32>, vector<8x256xf32> -> vector<8x256xf32>
    %55 = arith.addf %49, %54 : vector<8x256xf32>
    %c0_35 = arith.constant 0 : index
    %c0_36 = arith.constant 0 : index
    %c1536 = arith.constant 1536 : index
    %56 = vector.load %arg2[%c0_35, %c0_36, %c1536] : memref<1x4x4096xf32, #tpu.memory_space<vmem>>, vector<1x4x256xf32>
    %57 = vector.shape_cast %56 : vector<1x4x256xf32> to vector<4x256xf32>
    %58 = vector.extract_strided_slice %5 {offsets = [4, 0, 0], sizes = [1, 8, 4], strides = [1, 1, 1]} : vector<5x8x4xf32> to vector<1x8x4xf32>
    %59 = vector.shape_cast %58 : vector<1x8x4xf32> to vector<8x4xf32>
    %cst_37 = arith.constant dense<0.000000e+00> : vector<8x256xf32>
    %60 = tpu.matmul %59, %57, %cst_37 {dimension_numbers = #tpu.dot_dimension_numbers<[1], [0], [0], [1], [0, 0, 1, 1], [], []>} : vector<8x4xf32>, vector<4x256xf32>, vector<8x256xf32> -> vector<8x256xf32>
    %61 = arith.addf %55, %60 : vector<8x256xf32>
    %cst_38 = arith.constant 0.000000e+00 : f32
    %62 = vector.broadcast %cst_38 : f32 to vector<8x256xf32>
    %63 = arith.maximumf %61, %62 : vector<8x256xf32>
    %c0_39 = arith.constant 0 : index
    %c16_40 = arith.constant 16 : index
    %c256_41 = arith.constant 256 : index
    %64 = vector.load %arg5[%c0_39, %c16_40, %c256_41] : memref<1x24x1024xf32, #tpu.memory_space<vmem>>, vector<1x8x256xf32>
    %65 = vector.shape_cast %64 : vector<1x8x256xf32> to vector<8x256xf32>
    %66 = vector.shape_cast %63 : vector<8x256xf32> to vector<1x8x256xf32>
    tpu.vector_store %arg5[%c0_39, %c16_40, %c256_41], %66 {strides = array<i32>} : memref<1x24x1024xf32, #tpu.memory_space<vmem>>, vector<1x8x256xf32>,
    %c0_42 = arith.constant 0 : index
    %c0_43 = arith.constant 0 : index
    %c1536_44 = arith.constant 1536 : index
    %67 = vector.load %arg2[%c0_42, %c0_43, %c1536_44] : memref<1x4x4096xf32, #tpu.memory_space<vmem>>, vector<1x4x256xf32>
    %68 = vector.shape_cast %67 : vector<1x4x256xf32> to vector<4x256xf32>
    %69 = vector.extract_strided_slice %5 {offsets = [0, 0, 0], sizes = [1, 8, 4], strides = [1, 1, 1]} : vector<5x8x4xf32> to vector<1x8x4xf32>
    %70 = vector.shape_cast %69 : vector<1x8x4xf32> to vector<8x4xf32>
    %cst_45 = arith.constant dense<0.000000e+00> : vector<8x256xf32>
    %71 = tpu.matmul %70, %68, %cst_45 {dimension_numbers = #tpu.dot_dimension_numbers<[1], [0], [0], [1], [0, 0, 1, 1], [], []>} : vector<8x4xf32>, vector<4x256xf32>, vector<8x256xf32> -> vector<8x256xf32>
    %72 = arith.addf %8, %71 : vector<8x256xf32>
    %c0_46 = arith.constant 0 : index
    %c0_47 = arith.constant 0 : index
    %c1792 = arith.constant 1792 : index
    %73 = vector.load %arg2[%c0_46, %c0_47, %c1792] : memref<1x4x4096xf32, #tpu.memory_space<vmem>>, vector<1x4x256xf32>
    %74 = vector.shape_cast %73 : vector<1x4x256xf32> to vector<4x256xf32>
    %75 = vector.extract_strided_slice %5 {offsets = [1, 0, 0], sizes = [1, 8, 4], strides = [1, 1, 1]} : vector<5x8x4xf32> to vector<1x8x4xf32>
    %76 = vector.shape_cast %75 : vector<1x8x4xf32> to vector<8x4xf32>
    %cst_48 = arith.constant dense<0.000000e+00> : vector<8x256xf32>
    %77 = tpu.matmul %76, %74, %cst_48 {dimension_numbers = #tpu.dot_dimension_numbers<[1], [0], [0], [1], [0, 0, 1, 1], [], []>} : vector<8x4xf32>, vector<4x256xf32>, vector<8x256xf32> -> vector<8x256xf32>
    %78 = arith.addf %72, %77 : vector<8x256xf32>
    %c0_49 = arith.constant 0 : index
    %c0_50 = arith.constant 0 : index
    %c2048 = arith.constant 2048 : index
    %79 = vector.load %arg2[%c0_49, %c0_50, %c2048] : memref<1x4x4096xf32, #tpu.memory_space<vmem>>, vector<1x4x256xf32>
    %80 = vector.shape_cast %79 : vector<1x4x256xf32> to vector<4x256xf32>
    %81 = vector.extract_strided_slice %5 {offsets = [2, 0, 0], sizes = [1, 8, 4], strides = [1, 1, 1]} : vector<5x8x4xf32> to vector<1x8x4xf32>
    %82 = vector.shape_cast %81 : vector<1x8x4xf32> to vector<8x4xf32>
    %cst_51 = arith.constant dense<0.000000e+00> : vector<8x256xf32>
    %83 = tpu.matmul %82, %80, %cst_51 {dimension_numbers = #tpu.dot_dimension_numbers<[1], [0], [0], [1], [0, 0, 1, 1], [], []>} : vector<8x4xf32>, vector<4x256xf32>, vector<8x256xf32> -> vector<8x256xf32>
    %84 = arith.addf %78, %83 : vector<8x256xf32>
    %c0_52 = arith.constant 0 : index
    %c0_53 = arith.constant 0 : index
    %c2304 = arith.constant 2304 : index
    %85 = vector.load %arg2[%c0_52, %c0_53, %c2304] : memref<1x4x4096xf32, #tpu.memory_space<vmem>>, vector<1x4x256xf32>
    %86 = vector.shape_cast %85 : vector<1x4x256xf32> to vector<4x256xf32>
    %87 = vector.extract_strided_slice %5 {offsets = [3, 0, 0], sizes = [1, 8, 4], strides = [1, 1, 1]} : vector<5x8x4xf32> to vector<1x8x4xf32>
    %88 = vector.shape_cast %87 : vector<1x8x4xf32> to vector<8x4xf32>
    %cst_54 = arith.constant dense<0.000000e+00> : vector<8x256xf32>
    %89 = tpu.matmul %88, %86, %cst_54 {dimension_numbers = #tpu.dot_dimension_numbers<[1], [0], [0], [1], [0, 0, 1, 1], [], []>} : vector<8x4xf32>, vector<4x256xf32>, vector<8x256xf32> -> vector<8x256xf32>
    %90 = arith.addf %84, %89 : vector<8x256xf32>
    %c0_55 = arith.constant 0 : index
    %c0_56 = arith.constant 0 : index
    %c2560 = arith.constant 2560 : index
    %91 = vector.load %arg2[%c0_55, %c0_56, %c2560] : memref<1x4x4096xf32, #tpu.memory_space<vmem>>, vector<1x4x256xf32>
    %92 = vector.shape_cast %91 : vector<1x4x256xf32> to vector<4x256xf32>
    %93 = vector.extract_strided_slice %5 {offsets = [4, 0, 0], sizes = [1, 8, 4], strides = [1, 1, 1]} : vector<5x8x4xf32> to vector<1x8x4xf32>
    %94 = vector.shape_cast %93 : vector<1x8x4xf32> to vector<8x4xf32>
    %cst_57 = arith.constant dense<0.000000e+00> : vector<8x256xf32>
    %95 = tpu.matmul %94, %92, %cst_57 {dimension_numbers = #tpu.dot_dimension_numbers<[1], [0], [0], [1], [0, 0, 1, 1], [], []>} : vector<8x4xf32>, vector<4x256xf32>, vector<8x256xf32> -> vector<8x256xf32>
    %96 = arith.addf %90, %95 : vector<8x256xf32>
    %cst_58 = arith.constant 0.000000e+00 : f32
    %97 = vector.broadcast %cst_58 : f32 to vector<8x256xf32>
    %98 = arith.maximumf %96, %97 : vector<8x256xf32>
    %c0_59 = arith.constant 0 : index
    %c16_60 = arith.constant 16 : index
    %c512_61 = arith.constant 512 : index
    %99 = vector.load %arg5[%c0_59, %c16_60, %c512_61] : memref<1x24x1024xf32, #tpu.memory_space<vmem>>, vector<1x8x256xf32>
    %100 = vector.shape_cast %99 : vector<1x8x256xf32> to vector<8x256xf32>
    %101 = vector.shape_cast %98 : vector<8x256xf32> to vector<1x8x256xf32>
    tpu.vector_store %arg5[%c0_59, %c16_60, %c512_61], %101 {strides = array<i32>} : memref<1x24x1024xf32, #tpu.memory_space<vmem>>, vector<1x8x256xf32>,
    %c0_62 = arith.constant 0 : index
    %c0_63 = arith.constant 0 : index
    %c2560_64 = arith.constant 2560 : index
    %102 = vector.load %arg2[%c0_62, %c0_63, %c2560_64] : memref<1x4x4096xf32, #tpu.memory_space<vmem>>, vector<1x4x256xf32>
    %103 = vector.shape_cast %102 : vector<1x4x256xf32> to vector<4x256xf32>
    %104 = vector.extract_strided_slice %5 {offsets = [0, 0, 0], sizes = [1, 8, 4], strides = [1, 1, 1]} : vector<5x8x4xf32> to vector<1x8x4xf32>
    %105 = vector.shape_cast %104 : vector<1x8x4xf32> to vector<8x4xf32>
    %cst_65 = arith.constant dense<0.000000e+00> : vector<8x256xf32>
    %106 = tpu.matmul %105, %103, %cst_65 {dimension_numbers = #tpu.dot_dimension_numbers<[1], [0], [0], [1], [0, 0, 1, 1], [], []>} : vector<8x4xf32>, vector<4x256xf32>, vector<8x256xf32> -> vector<8x256xf32>
    %107 = arith.addf %8, %106 : vector<8x256xf32>
    %c0_66 = arith.constant 0 : index
    %c0_67 = arith.constant 0 : index
    %c2816 = arith.constant 2816 : index
    %108 = vector.load %arg2[%c0_66, %c0_67, %c2816] : memref<1x4x4096xf32, #tpu.memory_space<vmem>>, vector<1x4x256xf32>
    %109 = vector.shape_cast %108 : vector<1x4x256xf32> to vector<4x256xf32>
    %110 = vector.extract_strided_slice %5 {offsets = [1, 0, 0], sizes = [1, 8, 4], strides = [1, 1, 1]} : vector<5x8x4xf32> to vector<1x8x4xf32>
    %111 = vector.shape_cast %110 : vector<1x8x4xf32> to vector<8x4xf32>
    %cst_68 = arith.constant dense<0.000000e+00> : vector<8x256xf32>
    %112 = tpu.matmul %111, %109, %cst_68 {dimension_numbers = #tpu.dot_dimension_numbers<[1], [0], [0], [1], [0, 0, 1, 1], [], []>} : vector<8x4xf32>, vector<4x256xf32>, vector<8x256xf32> -> vector<8x256xf32>
    %113 = arith.addf %107, %112 : vector<8x256xf32>
    %c0_69 = arith.constant 0 : index
    %c0_70 = arith.constant 0 : index
    %c3072 = arith.constant 3072 : index
    %114 = vector.load %arg2[%c0_69, %c0_70, %c3072] : memref<1x4x4096xf32, #tpu.memory_space<vmem>>, vector<1x4x256xf32>
    %115 = vector.shape_cast %114 : vector<1x4x256xf32> to vector<4x256xf32>
    %116 = vector.extract_strided_slice %5 {offsets = [2, 0, 0], sizes = [1, 8, 4], strides = [1, 1, 1]} : vector<5x8x4xf32> to vector<1x8x4xf32>
    %117 = vector.shape_cast %116 : vector<1x8x4xf32> to vector<8x4xf32>
    %cst_71 = arith.constant dense<0.000000e+00> : vector<8x256xf32>
    %118 = tpu.matmul %117, %115, %cst_71 {dimension_numbers = #tpu.dot_dimension_numbers<[1], [0], [0], [1], [0, 0, 1, 1], [], []>} : vector<8x4xf32>, vector<4x256xf32>, vector<8x256xf32> -> vector<8x256xf32>
    %119 = arith.addf %113, %118 : vector<8x256xf32>
    %c0_72 = arith.constant 0 : index
    %c0_73 = arith.constant 0 : index
    %c3328 = arith.constant 3328 : index
    %120 = vector.load %arg2[%c0_72, %c0_73, %c3328] : memref<1x4x4096xf32, #tpu.memory_space<vmem>>, vector<1x4x256xf32>
    %121 = vector.shape_cast %120 : vector<1x4x256xf32> to vector<4x256xf32>
    %122 = vector.extract_strided_slice %5 {offsets = [3, 0, 0], sizes = [1, 8, 4], strides = [1, 1, 1]} : vector<5x8x4xf32> to vector<1x8x4xf32>
    %123 = vector.shape_cast %122 : vector<1x8x4xf32> to vector<8x4xf32>
    %cst_74 = arith.constant dense<0.000000e+00> : vector<8x256xf32>
    %124 = tpu.matmul %123, %121, %cst_74 {dimension_numbers = #tpu.dot_dimension_numbers<[1], [0], [0], [1], [0, 0, 1, 1], [], []>} : vector<8x4xf32>, vector<4x256xf32>, vector<8x256xf32> -> vector<8x256xf32>
    %125 = arith.addf %119, %124 : vector<8x256xf32>
    %c0_75 = arith.constant 0 : index
    %c0_76 = arith.constant 0 : index
    %c3584 = arith.constant 3584 : index
    %126 = vector.load %arg2[%c0_75, %c0_76, %c3584] : memref<1x4x4096xf32, #tpu.memory_space<vmem>>, vector<1x4x256xf32>
    %127 = vector.shape_cast %126 : vector<1x4x256xf32> to vector<4x256xf32>
    %128 = vector.extract_strided_slice %5 {offsets = [4, 0, 0], sizes = [1, 8, 4], strides = [1, 1, 1]} : vector<5x8x4xf32> to vector<1x8x4xf32>
    %129 = vector.shape_cast %128 : vector<1x8x4xf32> to vector<8x4xf32>
    %cst_77 = arith.constant dense<0.000000e+00> : vector<8x256xf32>
    %130 = tpu.matmul %129, %127, %cst_77 {dimension_numbers = #tpu.dot_dimension_numbers<[1], [0], [0], [1], [0, 0, 1, 1], [], []>} : vector<8x4xf32>, vector<4x256xf32>, vector<8x256xf32> -> vector<8x256xf32>
    %131 = arith.addf %125, %130 : vector<8x256xf32>
    %cst_78 = arith.constant 0.000000e+00 : f32
    %132 = vector.broadcast %cst_78 : f32 to vector<8x256xf32>
    %133 = arith.maximumf %131, %132 : vector<8x256xf32>
    %c0_79 = arith.constant 0 : index
    %c16_80 = arith.constant 16 : index
    %c768_81 = arith.constant 768 : index
    %134 = vector.load %arg5[%c0_79, %c16_80, %c768_81] : memref<1x24x1024xf32, #tpu.memory_space<vmem>>, vector<1x8x256xf32>
    %135 = vector.shape_cast %134 : vector<1x8x256xf32> to vector<8x256xf32>
    %136 = vector.shape_cast %133 : vector<8x256xf32> to vector<1x8x256xf32>
    tpu.vector_store %arg5[%c0_79, %c16_80, %c768_81], %136 {strides = array<i32>} : memref<1x24x1024xf32, #tpu.memory_space<vmem>>, vector<1x8x256xf32>,
    return
  }
  func.func @transform_0(%arg0: i32) -> (i32, i32, i32) {
    %c0_i32 = arith.constant 0 : i32
    %c0_i32_0 = arith.constant 0 : i32
    %c0_i32_1 = arith.constant 0 : i32
    return %arg0, %c0_i32, %c0_i32_0 : i32, i32, i32
  }
  func.func @transform_1(%arg0: i32) -> (i32, i32, i32) {
    %c0_i32 = arith.constant 0 : i32
    %c0_i32_0 = arith.constant 0 : i32
    %c0_i32_1 = arith.constant 0 : i32
    return %arg0, %c0_i32, %c0_i32_0 : i32, i32, i32
  }
  func.func @transform_2(%arg0: i32) -> (i32, i32, i32) {
    %c0_i32 = arith.constant 0 : i32
    %c0_i32_0 = arith.constant 0 : i32
    %c0_i32_1 = arith.constant 0 : i32
    %c0_i32_2 = arith.constant 0 : i32
    return %c0_i32, %c0_i32_0, %c0_i32_1 : i32, i32, i32
  }
  func.func @transform_3(%arg0: i32) -> (i32, i32) {
    %c0_i32 = arith.constant 0 : i32
    %c0_i32_0 = arith.constant 0 : i32
    %c0_i32_1 = arith.constant 0 : i32
    return %c0_i32, %c0_i32_0 : i32, i32
  }
  func.func @transform_4(%arg0: i32) -> (i32, i32, i32) {
    %c0_i32 = arith.constant 0 : i32
    %c0_i32_0 = arith.constant 0 : i32
    %c0_i32_1 = arith.constant 0 : i32
    return %arg0, %c0_i32, %c0_i32_0 : i32, i32, i32
  }
}

</mosaic_0001>

<llo_original>
// kernel: fuse_fast_to_slow.1
$region0: #{fuse_fast_to_slow.1}
  #allocation0 [shape = 'u32[]', space=smem, size = 0x4, offset = 0x4, fixed_abs, tag = 'smem constant byte address 0x4 - core index']
  #allocation1 [shape = 'u32[144,128]{1,0:T(1,128)}', space=vmem, size = 0x12000, scoped, tag = 'internal scratch']
  %s0 = inlined_call_operand.vmem [shape: f32[2,16,1024], index: 0, kind: input, shape index: {}]
  %s1 = inlined_call_operand.vmem [shape: f32[2,4,4096], index: 1, kind: input, shape index: {}]
  %s2 = inlined_call_operand.vmem [shape: f32[5,8,4], index: 2, kind: input, shape index: {}]
  %s3 = inlined_call_operand.vmem [shape: f32[8,1], index: 3, kind: input, shape index: {}]
  %s4 = inlined_call_operand.vmem [shape: f32[2,24,1024], index: 4, kind: output, shape index: {}]
  %s5 = sld [smem:[#allocation0]]
  $region49: #{fuse_fast_to_slow.1} parent=0
    _
  %s7 = ssub.s32 1, %s5
  %s8 = scalar_select 0, %s7, %s5
  loop: start=0, step=1, limit=4
  $region2: #{fuse_fast_to_slow.1} parent=0 // loop_pre_header
    _
  $region3: #{fuse_fast_to_slow.1} parent=0 // loop_header
    %s10 = sphi 0, %s14
    %p11 = scmp.ge.s32.totalorder %s10, 4
    %s20 = sphi 0, %s22
    %s23 = sphi 0, %s20
    %s24 = sphi 0, %s23
    %s40 = sphi 0, %s24
    %s46 = sphi 0, %s48
    %s49 = sphi 0, %s46
    %s50 = sphi 0, %s49
    %s66 = sphi 0, %s50
    %s70 = sphi 0, %s70
    %s72 = sphi 0, %s70
    %s73 = sphi 0, %s72
    %s87 = sphi 0, %s73
    %s91 = sphi 0, %s91
    %s93 = sphi 0, %s91
    %s94 = sphi 0, %s93
    %s108 = sphi 0, %s94
    %s114 = sphi 0, %s116
    %s117 = sphi 0, %s114
    %s118 = sphi 0, %s117
    %s134 = sphi 0, %s118
  $region4: #{fuse_fast_to_slow.1} parent=0 // loop_header_branch
    %13 = sbr.rel (%p11) target = $region8
  $region5: #{fuse_fast_to_slow.1} parent=0 // loop_body
    %s15 = ssub.s32 %s10, 1
    %s16 = ssub.s32 %s10, 2
    %s17 = sadd.s32 %s10, 1
    %s18 = ssub.s32 %s10, %s17
    %p19 = scmp.eq.s32.totalorder %s18, 0
    %s21 = sadd.s32 %s20, 1
    %s22 = scalar_select %p19, %s20, %s21
    %p25 = pneg %p19
    %p26 = scmp.eq.s32.totalorder %s10, 1
    %p27 = por %p25, %p26
    %p28 = scmp.ne.s32.totalorder %s20, %s23
    %p29 = scmp.eq.s32.totalorder %s10, 0
    %p30 = por %p28, %p29
    %p31 = scmp.ne.s32.totalorder %s20, %s23
    %p32 = scmp.eq.s32.totalorder %s15, 1
    %p33 = por %p31, %p32
    %p34 = scmp.ne.s32.totalorder %s23, %s24
    %p35 = scmp.eq.s32.totalorder %s15, 0
    %p36 = por %p34, %p35
    %p37 = scmp.ne.s32.totalorder %s23, %s24
    %p38 = scmp.eq.s32.totalorder %s16, 1
    %p39 = por %p37, %p38
    %p41 = scmp.ne.s32.totalorder %s24, %s40
    %p42 = scmp.eq.s32.totalorder %s16, 0
    %p43 = por %p41, %p42
    %s44 = ssub.s32 %s10, %s17
    %p45 = scmp.eq.s32.totalorder %s44, 0
    %s47 = sadd.s32 %s46, 1
    %s48 = scalar_select %p45, %s46, %s47
    %p51 = pneg %p45
    %p52 = scmp.eq.s32.totalorder %s10, 1
    %p53 = por %p51, %p52
    %p54 = scmp.ne.s32.totalorder %s46, %s49
    %p55 = scmp.eq.s32.totalorder %s10, 0
    %p56 = por %p54, %p55
    %p57 = scmp.ne.s32.totalorder %s46, %s49
    %p58 = scmp.eq.s32.totalorder %s15, 1
    %p59 = por %p57, %p58
    %p60 = scmp.ne.s32.totalorder %s49, %s50
    %p61 = scmp.eq.s32.totalorder %s15, 0
    %p62 = por %p60, %p61
    %p63 = scmp.ne.s32.totalorder %s49, %s50
    %p64 = scmp.eq.s32.totalorder %s16, 1
    %p65 = por %p63, %p64
    %p67 = scmp.ne.s32.totalorder %s50, %s66
    %p68 = scmp.eq.s32.totalorder %s16, 0
    %p69 = por %p67, %p68
    %s71 = sadd.s32 %s70, 1
    %p74 = scmp.eq.s32.totalorder %s10, 1
    %p75 = scmp.ne.s32.totalorder %s70, %s72
    %p76 = scmp.eq.s32.totalorder %s10, 0
    %p77 = por %p75, %p76
    %p78 = scmp.ne.s32.totalorder %s70, %s72
    %p79 = scmp.eq.s32.totalorder %s15, 1
    %p80 = por %p78, %p79
    %p81 = scmp.ne.s32.totalorder %s72, %s73
    %p82 = scmp.eq.s32.totalorder %s15, 0
    %p83 = por %p81, %p82
    %p84 = scmp.ne.s32.totalorder %s72, %s73
    %p85 = scmp.eq.s32.totalorder %s16, 1
    %p86 = por %p84, %p85
    %p88 = scmp.ne.s32.totalorder %s73, %s87
    %p89 = scmp.eq.s32.totalorder %s16, 0
    %p90 = por %p88, %p89
    %s92 = sadd.s32 %s91, 1
    %p95 = scmp.eq.s32.totalorder %s10, 1
    %p96 = scmp.ne.s32.totalorder %s91, %s93
    %p97 = scmp.eq.s32.totalorder %s10, 0
    %p98 = por %p96, %p97
    %p99 = scmp.ne.s32.totalorder %s91, %s93
    %p100 = scmp.eq.s32.totalorder %s15, 1
    %p101 = por %p99, %p100
    %p102 = scmp.ne.s32.totalorder %s93, %s94
    %p103 = scmp.eq.s32.totalorder %s15, 0
    %p104 = por %p102, %p103
    %p105 = scmp.ne.s32.totalorder %s93, %s94
    %p106 = scmp.eq.s32.totalorder %s16, 1
    %p107 = por %p105, %p106
    %p109 = scmp.ne.s32.totalorder %s94, %s108
    %p110 = scmp.eq.s32.totalorder %s16, 0
    %p111 = por %p109, %p110
    %s112 = ssub.s32 %s10, %s17
    %p113 = scmp.eq.s32.totalorder %s112, 0
    %s115 = sadd.s32 %s114, 1
    %s116 = scalar_select %p113, %s114, %s115
    %p119 = pneg %p113
    %p120 = scmp.eq.s32.totalorder %s10, 1
    %p121 = por %p119, %p120
    %p122 = scmp.ne.s32.totalorder %s114, %s117
    %p123 = scmp.eq.s32.totalorder %s10, 0
    %p124 = por %p122, %p123
    %p125 = scmp.ne.s32.totalorder %s114, %s117
    %p126 = scmp.eq.s32.totalorder %s15, 1
    %p127 = por %p125, %p126
    %p128 = scmp.ne.s32.totalorder %s117, %s118
    %p129 = scmp.eq.s32.totalorder %s15, 0
    %p130 = por %p128, %p129
    %p131 = scmp.ne.s32.totalorder %s117, %s118
    %p132 = scmp.eq.s32.totalorder %s16, 1
    %p133 = por %p131, %p132
    %p135 = scmp.ne.s32.totalorder %s118, %s134
    %p136 = scmp.eq.s32.totalorder %s16, 0
    %p137 = por %p135, %p136
    %p138 = scmp.le.s32.totalorder 1, %s10
    %p139 = scmp.lt.s32.totalorder %s10, 3
    %p140 = pnand %p138, %p139
    %p141 = pneg %p140
    // Predicated region
    $region9: #{fuse_fast_to_slow.1} parent=5 // pred_check
      _
    $region10: #{fuse_fast_to_slow.1} parent=5 // pred_check_branch
      %143 = sbr.rel (%p140) target = $region12
    $region11: #{fuse_fast_to_slow.1} parent=5 // pred_region
      %s144 = ssub.s32 %s10, 1
      // Predicated region
      $region13: #{fuse_fast_to_slow.1} parent=11 // pred_check
        %p145 = pneg %p83
      $region14: #{fuse_fast_to_slow.1} parent=11 // pred_check_branch
        %147 = sbr.rel (%p145) target = $region16
      $region15: #{fuse_fast_to_slow.1} parent=11 // pred_region
        _
      $region16: #{fuse_fast_to_slow.1} parent=11 // pred_fallthru
        _
      // Predicated region
      $region17: #{fuse_fast_to_slow.1} parent=11 // pred_check
        %p148 = pneg %p104
      $region18: #{fuse_fast_to_slow.1} parent=11 // pred_check_branch
        %150 = sbr.rel (%p148) target = $region20
      $region19: #{fuse_fast_to_slow.1} parent=11 // pred_region
        _
      $region20: #{fuse_fast_to_slow.1} parent=11 // pred_fallthru
        _
    $region12: #{fuse_fast_to_slow.1} parent=5 // pred_fallthru
      _
    %p151 = scmp.lt.s32.totalorder %s10, 2
    // Predicated region
    $region21: #{fuse_fast_to_slow.1} parent=5 // pred_check
      %p152 = pneg %p151
    $region22: #{fuse_fast_to_slow.1} parent=5 // pred_check_branch
      %154 = sbr.rel (%p152) target = $region24
    $region23: #{fuse_fast_to_slow.1} parent=5 // pred_region
      // Predicated region
      $region25: #{fuse_fast_to_slow.1} parent=23 // pred_check
        %p155 = pneg %p30
      $region26: #{fuse_fast_to_slow.1} parent=23 // pred_check_branch
        %157 = sbr.rel (%p155) target = $region28
      $region27: #{fuse_fast_to_slow.1} parent=23 // pred_region
        %p158 = scmp.lt.s32.totalorder %s10, 1
        %s159 = scalar_select %p158, %s10, 1
        %s160 = smul.addr %s159, 16
        %s161 = smul.addr %s160, 8
        %s162 = scalar_lea.vmem %s0, %s161
      $region28: #{fuse_fast_to_slow.1} parent=23 // pred_fallthru
        _
      // Predicated region
      $region29: #{fuse_fast_to_slow.1} parent=23 // pred_check
        %p163 = pneg %p56
      $region30: #{fuse_fast_to_slow.1} parent=23 // pred_check_branch
        %165 = sbr.rel (%p163) target = $region32
      $region31: #{fuse_fast_to_slow.1} parent=23 // pred_region
        %p166 = scmp.lt.s32.totalorder %s10, 1
        %s167 = scalar_select %p166, %s10, 1
        %s168 = smul.addr %s167, 32
        %s169 = smul.addr %s168, 4
        %s170 = scalar_lea.vmem %s1, %s169
      $region32: #{fuse_fast_to_slow.1} parent=23 // pred_fallthru
        _
    $region24: #{fuse_fast_to_slow.1} parent=5 // pred_fallthru
      _
    %p171 = scmp.le.s32.totalorder 1, %s10
    %p172 = scmp.lt.s32.totalorder %s10, 3
    %p173 = pnand %p171, %p172
    %p174 = pneg %p173
    // Predicated region
    $region33: #{fuse_fast_to_slow.1} parent=5 // pred_check
      _
    $region34: #{fuse_fast_to_slow.1} parent=5 // pred_check_branch
      %176 = sbr.rel (%p173) target = $region36
    $region35: #{fuse_fast_to_slow.1} parent=5 // pred_region
      %s177 = ssub.s32 %s10, 1
      %p178 = scmp.lt.s32.totalorder %s15, 1
      %s179 = scalar_select %p178, %s15, 1
      %s180 = smul.addr %s179, 16
      %s181 = smul.addr %s180, 8
      %s182 = scalar_lea.vmem %s0, %s181
      %p183 = pneg %p36
      %p184 = pneg %p33
      %p185 = scmp.lt.s32.totalorder %s15, 1
      %s186 = scalar_select %p185, %s15, 1
      %s187 = smul.addr %s186, 32
      %s188 = smul.addr %s187, 4
      %s189 = scalar_lea.vmem %s1, %s188
      %p190 = pneg %p62
      %p191 = pneg %p59
      %p192 = pneg %p83
      %p193 = pneg %p80
      %p194 = pneg %p104
      %p195 = pneg %p101
      %p196 = pneg %p130
      %p197 = pneg %p127
      %p198 = scmp.lt.s32.totalorder %s15, 1
      %s199 = scalar_select %p198, %s15, 1
      %s200 = smul.addr %s199, 24
      %s201 = smul.addr %s200, 8
      %s202 = scalar_lea.vmem %s4, %s201
      %p203 = scmp.lt.s32.totalorder %s15, 1
      %s204 = scalar_select %p203, %s15, 1
      %s205 = smul.addr %s204, 16
      %s206 = smul.addr %s205, 8
      %s207 = scalar_lea.vmem %s0, %s206
      %p208 = scmp.lt.s32.totalorder %s15, 1
      %s209 = scalar_select %p208, %s15, 1
      %s210 = smul.addr %s209, 32
      %s211 = smul.addr %s210, 4
      %s212 = scalar_lea.vmem %s1, %s211
      %p213 = scmp.lt.s32.totalorder %s15, 1
      %s214 = scalar_select %p213, %s15, 1
      %s215 = smul.addr %s214, 24
      %s216 = smul.addr %s215, 8
      %s217 = scalar_lea.vmem %s4, %s216
      %v218 = vld [vmem:[%s207] sm:$0xff]
      %v219 = vld [vmem:[%s207 + $0x8] sm:$0xff]
      %v220 = vld [vmem:[%s207 + $0x10] sm:$0xff]
      %v221 = vld [vmem:[%s207 + $0x18] sm:$0xff]
      %v222 = vld [vmem:[%s207 + $0x20] sm:$0xff]
      %v223 = vld [vmem:[%s207 + $0x28] sm:$0xff]
      %v224 = vld [vmem:[%s207 + $0x30] sm:$0xff]
      %v225 = vld [vmem:[%s207 + $0x38] sm:$0xff]
      %v226 = vld [vmem:[%s207 + $0x40] sm:$0xff]
      %v227 = vld [vmem:[%s207 + $0x48] sm:$0xff]
      %v228 = vld [vmem:[%s207 + $0x50] sm:$0xff]
      %v229 = vld [vmem:[%s207 + $0x58] sm:$0xff]
      %v230 = vld [vmem:[%s207 + $0x60] sm:$0xff]
      %v231 = vld [vmem:[%s207 + $0x68] sm:$0xff]
      %v232 = vld [vmem:[%s207 + $0x70] sm:$0xff]
      %v233 = vld [vmem:[%s207 + $0x78] sm:$0xff]
      %234 = vst [vmem:[%s217] sm:$0xff] %v218
      %235 = vst [vmem:[%s217 + $0x8] sm:$0xff] %v219
      %236 = vst [vmem:[%s217 + $0x10] sm:$0xff] %v220
      %237 = vst [vmem:[%s217 + $0x18] sm:$0xff] %v221
      %238 = vst [vmem:[%s217 + $0x20] sm:$0xff] %v222
      %239 = vst [vmem:[%s217 + $0x28] sm:$0xff] %v223
      %240 = vst [vmem:[%s217 + $0x30] sm:$0xff] %v224
      %241 = vst [vmem:[%s217 + $0x38] sm:$0xff] %v225
      %242 = vst [vmem:[%s217 + $0x40] sm:$0xff] %v226
      %243 = vst [vmem:[%s217 + $0x48] sm:$0xff] %v227
      %244 = vst [vmem:[%s217 + $0x50] sm:$0xff] %v228
      %245 = vst [vmem:[%s217 + $0x58] sm:$0xff] %v229
      %246 = vst [vmem:[%s217 + $0x60] sm:$0xff] %v230
      %247 = vst [vmem:[%s217 + $0x68] sm:$0xff] %v231
      %248 = vst [vmem:[%s217 + $0x70] sm:$0xff] %v232
      %249 = vst [vmem:[%s217 + $0x78] sm:$0xff] %v233
      %v250 = vld [vmem:[%s2] sm:$0xff]
      %v251 = vld [vmem:[%s2 + $0x8] sm:$0xff]
      %v252 = vld [vmem:[%s2 + $0x10] sm:$0xff]
      %v253 = vld [vmem:[%s2 + $0x18] sm:$0xff]
      %v254 = vld [vmem:[%s2 + $0x20] sm:$0xff]
      %v255 = vld [vmem:[%s3] sm:$0xff]
      %257 = vset.pattern.permute.xlu0 0
      %258 = vperm.xlu0 %257, %v255
      %v259 = vpop.permute.xlu0 %258
      %v261 = vld [vmem:[%s212] sm:$0xff]
      %v263 = vcombine.high %v261, %v261
      %vm264 = vcmask 31744
      %v266 = vsel %vm264, %v252, 0
      %vm268 = vcmask 1043456
      %v269 = vsel %vm268, %v261, 0
      %v271 = vsel %vm268, %v263, 0
      %273 = vmatprep.subr.mxu0 %v271
      %274 = vmatpush1.msra.mxu0 %v269
      %275 = vmatprep.subr.mxu0 0.0
      %276 = vmatpush1.msra.mxu0 0.0
      %277 = vmatprep.subr.mxu0 0.0
      %278 = vmatpush1.msra.mxu0 0.0
      %279 = vmatprep.subr.mxu0 0.0
      %280 = vmatpush1.msra.mxu0 0.0
      %281 = vmatprep.subr.mxu0 0.0
      %282 = vmatpush1.msra.mxu0 0.0
      %283 = vmatprep.subr.mxu0 0.0
      %284 = vmatpush1.msra.mxu0 0.0
      %285 = vmatprep.subr.mxu0 0.0
      %286 = vmatpush1.msra.mxu0 0.0
      %287 = vmatprep.subr.mxu0 0.0
      %288 = vmatpush1.msra.mxu0 0.0
      %289 = vmatprep.subr.mxu0 0.0
      %290 = vmatpush1.msra.mxu0 0.0
      %291 = vmatprep.subr.mxu0 0.0
      %292 = vmatpush1.msra.mxu0 0.0
      %293 = vmatprep.subr.mxu0 0.0
      %294 = vmatpush1.msra.mxu0 0.0
      %295 = vmatprep.subr.mxu0 0.0
      %296 = vmatpush1.msra.mxu0 0.0
      %297 = vmatprep.subr.mxu0 0.0
      %298 = vmatpush1.msra.mxu0 0.0
      %299 = vmatprep.subr.mxu0 0.0
      %300 = vmatpush1.msra.mxu0 0.0
      %301 = vmatprep.subr.mxu0 0.0
      %302 = vmatpush1.msra.mxu0 0.0
      %303 = vmatprep.subr.mxu0 0.0
      %304 = vmatpush1.msra.mxu0 0.0
      %305 = vmatprep.subr.mxu0 0.0
      %306 = vmatpush1.msra.mxu0 0.0
      %307 = vmatprep.subr.mxu0 0.0
      %308 = vmatpush1.msra.mxu0 0.0
      %309 = vmatprep.subr.mxu0 0.0
      %310 = vmatpush1.msra.mxu0 0.0
      %311 = vmatprep.subr.mxu0 0.0
      %312 = vmatpush1.msra.mxu0 0.0
      %313 = vmatprep.subr.mxu0 0.0
      %314 = vmatpush1.msra.mxu0 0.0
      %315 = vmatprep.subr.mxu0 0.0
      %316 = vmatpush1.msra.mxu0 0.0
      %317 = vmatprep.subr.mxu0 0.0
      %318 = vmatpush1.msra.mxu0 0.0
      %319 = vmatprep.subr.mxu0 0.0
      %320 = vmatpush1.msra.mxu0 0.0
      %321 = vmatprep.subr.mxu0 0.0
      %322 = vmatpush1.msra.mxu0 0.0
      %323 = vmatprep.subr.mxu0 0.0
      %324 = vmatpush1.msra.mxu0 0.0
      %325 = vmatprep.subr.mxu0 0.0
      %326 = vmatpush1.msra.mxu0 0.0
      %327 = vmatprep.subr.mxu0 0.0
      %328 = vmatpush1.msra.mxu0 0.0
      %329 = vmatprep.subr.mxu0 0.0
      %330 = vmatpush1.msra.mxu0 0.0
      %331 = vmatprep.subr.mxu0 0.0
      %332 = vmatpush1.msra.mxu0 0.0
      %333 = vmatprep.subr.mxu0 0.0
      %334 = vmatpush1.msra.mxu0 0.0
      %335 = vmatprep.subr.mxu0 0.0
      %336 = vmatpush1.msra.mxu0 0.0
      %337 = vmatprep.mubr.f32.mxu0 0.0
      %338 = vmatmul.mubr.f32.gmra.mrb[0].mxu0 %v266
      %v339 = vpop.f32.mrb[0].mxu0
      %v340 = vadd.f32 0.0, %v339
      %v341 = vpop.f32.mrb[0].mxu0
      %v342 = vadd.f32 0.0, %v341
      %343 = vdwg.mxu0
      %v344 = vadd.f32 %v259, %v340
      %v345 = vadd.f32 %v259, %v342
      %v346 = vld [vmem:[%s212 + $0x8] sm:$0xff]
      %v348 = vcombine.high %v346, %v346
      %v350 = vsel %vm264, %v253, 0
      %v352 = vsel %vm268, %v346, 0
      %v354 = vsel %vm268, %v348, 0
      %356 = vmatprep.subr.mxu0 %v354
      %357 = vmatpush1.msra.mxu0 %v352
      %358 = vmatprep.subr.mxu0 0.0
      %359 = vmatpush1.msra.mxu0 0.0
      %360 = vmatprep.subr.mxu0 0.0
      %361 = vmatpush1.msra.mxu0 0.0
      %362 = vmatprep.subr.mxu0 0.0
      %363 = vmatpush1.msra.mxu0 0.0
      %364 = vmatprep.subr.mxu0 0.0
      %365 = vmatpush1.msra.mxu0 0.0
      %366 = vmatprep.subr.mxu0 0.0
      %367 = vmatpush1.msra.mxu0 0.0
      %368 = vmatprep.subr.mxu0 0.0
      %369 = vmatpush1.msra.mxu0 0.0
      %370 = vmatprep.subr.mxu0 0.0
      %371 = vmatpush1.msra.mxu0 0.0
      %372 = vmatprep.subr.mxu0 0.0
      %373 = vmatpush1.msra.mxu0 0.0
      %374 = vmatprep.subr.mxu0 0.0
      %375 = vmatpush1.msra.mxu0 0.0
      %376 = vmatprep.subr.mxu0 0.0
      %377 = vmatpush1.msra.mxu0 0.0
      %378 = vmatprep.subr.mxu0 0.0
      %379 = vmatpush1.msra.mxu0 0.0
      %380 = vmatprep.subr.mxu0 0.0
      %381 = vmatpush1.msra.mxu0 0.0
      %382 = vmatprep.subr.mxu0 0.0
      %383 = vmatpush1.msra.mxu0 0.0
      %384 = vmatprep.subr.mxu0 0.0
      %385 = vmatpush1.msra.mxu0 0.0
      %386 = vmatprep.subr.mxu0 0.0
      %387 = vmatpush1.msra.mxu0 0.0
      %388 = vmatprep.subr.mxu0 0.0
      %389 = vmatpush1.msra.mxu0 0.0
      %390 = vmatprep.subr.mxu0 0.0
      %391 = vmatpush1.msra.mxu0 0.0
      %392 = vmatprep.subr.mxu0 0.0
      %393 = vmatpush1.msra.mxu0 0.0
      %394 = vmatprep.subr.mxu0 0.0
      %395 = vmatpush1.msra.mxu0 0.0
      %396 = vmatprep.subr.mxu0 0.0
      %397 = vmatpush1.msra.mxu0 0.0
      %398 = vmatprep.subr.mxu0 0.0
      %399 = vmatpush1.msra.mxu0 0.0
      %400 = vmatprep.subr.mxu0 0.0
      %401 = vmatpush1.msra.mxu0 0.0
      %402 = vmatprep.subr.mxu0 0.0
      %403 = vmatpush1.msra.mxu0 0.0
      %404 = vmatprep.subr.mxu0 0.0
      %405 = vmatpush1.msra.mxu0 0.0
      %406 = vmatprep.subr.mxu0 0.0
      %407 = vmatpush1.msra.mxu0 0.0
      %408 = vmatprep.subr.mxu0 0.0
      %409 = vmatpush1.msra.mxu0 0.0
      %410 = vmatprep.subr.mxu0 0.0
      %411 = vmatpush1.msra.mxu0 0.0
      %412 = vmatprep.subr.mxu0 0.0
      %413 = vmatpush1.msra.mxu0 0.0
      %414 = vmatprep.subr.mxu0 0.0
      %415 = vmatpush1.msra.mxu0 0.0
      %416 = vmatprep.subr.mxu0 0.0
      %417 = vmatpush1.msra.mxu0 0.0
      %418 = vmatprep.subr.mxu0 0.0
      %419 = vmatpush1.msra.mxu0 0.0
      %420 = vmatprep.mubr.f32.mxu0 0.0
      %421 = vmatmul.mubr.f32.gmra.mrb[0].mxu0 %v350
      %v422 = vpop.f32.mrb[0].mxu0
      %v423 = vadd.f32 0.0, %v422
      %v424 = vpop.f32.mrb[0].mxu0
      %v425 = vadd.f32 0.0, %v424
      %426 = vdwg.mxu0
      %v427 = vadd.f32 %v344, %v423
      %v428 = vadd.f32 %v345, %v425
      %v429 = vld [vmem:[%s212 + $0x10] sm:$0xff]
      %v431 = vcombine.high %v429, %v429
      %v433 = vsel %vm264, %v254, 0
      %v435 = vsel %vm268, %v429, 0
      %v437 = vsel %vm268, %v431, 0
      %439 = vmatprep.subr.mxu0 %v437
      %440 = vmatpush1.msra.mxu0 %v435
      %441 = vmatprep.subr.mxu0 0.0
      %442 = vmatpush1.msra.mxu0 0.0
      %443 = vmatprep.subr.mxu0 0.0
      %444 = vmatpush1.msra.mxu0 0.0
      %445 = vmatprep.subr.mxu0 0.0
      %446 = vmatpush1.msra.mxu0 0.0
      %447 = vmatprep.subr.mxu0 0.0
      %448 = vmatpush1.msra.mxu0 0.0
      %449 = vmatprep.subr.mxu0 0.0
      %450 = vmatpush1.msra.mxu0 0.0
      %451 = vmatprep.subr.mxu0 0.0
      %452 = vmatpush1.msra.mxu0 0.0
      %453 = vmatprep.subr.mxu0 0.0
      %454 = vmatpush1.msra.mxu0 0.0
      %455 = vmatprep.subr.mxu0 0.0
      %456 = vmatpush1.msra.mxu0 0.0
      %457 = vmatprep.subr.mxu0 0.0
      %458 = vmatpush1.msra.mxu0 0.0
      %459 = vmatprep.subr.mxu0 0.0
      %460 = vmatpush1.msra.mxu0 0.0
      %461 = vmatprep.subr.mxu0 0.0
      %462 = vmatpush1.msra.mxu0 0.0
      %463 = vmatprep.subr.mxu0 0.0
      %464 = vmatpush1.msra.mxu0 0.0
      %465 = vmatprep.subr.mxu0 0.0
      %466 = vmatpush1.msra.mxu0 0.0
      %467 = vmatprep.subr.mxu0 0.0
      %468 = vmatpush1.msra.mxu0 0.0
      %469 = vmatprep.subr.mxu0 0.0
      %470 = vmatpush1.msra.mxu0 0.0
      %471 = vmatprep.subr.mxu0 0.0
      %472 = vmatpush1.msra.mxu0 0.0
      %473 = vmatprep.subr.mxu0 0.0
      %474 = vmatpush1.msra.mxu0 0.0
      %475 = vmatprep.subr.mxu0 0.0
      %476 = vmatpush1.msra.mxu0 0.0
      %477 = vmatprep.subr.mxu0 0.0
      %478 = vmatpush1.msra.mxu0 0.0
      %479 = vmatprep.subr.mxu0 0.0
      %480 = vmatpush1.msra.mxu0 0.0
      %481 = vmatprep.subr.mxu0 0.0
      %482 = vmatpush1.msra.mxu0 0.0
      %483 = vmatprep.subr.mxu0 0.0
      %484 = vmatpush1.msra.mxu0 0.0
      %485 = vmatprep.subr.mxu0 0.0
      %486 = vmatpush1.msra.mxu0 0.0
      %487 = vmatprep.subr.mxu0 0.0
      %488 = vmatpush1.msra.mxu0 0.0
      %489 = vmatprep.subr.mxu0 0.0
      %490 = vmatpush1.msra.mxu0 0.0
      %491 = vmatprep.subr.mxu0 0.0
      %492 = vmatpush1.msra.mxu0 0.0
      %493 = vmatprep.subr.mxu0 0.0
      %494 = vmatpush1.msra.mxu0 0.0
      %495 = vmatprep.subr.mxu0 0.0
      %496 = vmatpush1.msra.mxu0 0.0
      %497 = vmatprep.subr.mxu0 0.0
      %498 = vmatpush1.msra.mxu0 0.0
      %499 = vmatprep.subr.mxu0 0.0
      %500 = vmatpush1.msra.mxu0 0.0
      %501 = vmatprep.subr.mxu0 0.0
      %502 = vmatpush1.msra.mxu0 0.0
      %503 = vmatprep.mubr.f32.mxu0 0.0
      %504 = vmatmul.mubr.f32.gmra.mrb[0].mxu0 %v433
      %v505 = vpop.f32.mrb[0].mxu0
      %v506 = vadd.f32 0.0, %v505
      %v507 = vpop.f32.mrb[0].mxu0
      %v508 = vadd.f32 0.0, %v507
      %509 = vdwg.mxu0
      %v510 = vadd.f32 %v427, %v506
      %v511 = vadd.f32 %v428, %v508
      %v512 = vmax.f32 %v510, 0.0
      %v513 = vmax.f32 %v511, 0.0
      %514 = vst [vmem:[%s217 + $0x80] sm:$0xff] %v512
      %515 = vst [vmem:[%s217 + $0x88] sm:$0xff] %v513
      %v516 = vld [vmem:[%s212 + $0x10] sm:$0xff]
      %v518 = vcombine.high %v516, %v516
      %v520 = vsel %vm264, %v250, 0
      %v522 = vsel %vm268, %v516, 0
      %v524 = vsel %vm268, %v518, 0
      %526 = vmatprep.subr.mxu0 %v524
      %527 = vmatpush1.msra.mxu0 %v522
      %528 = vmatprep.subr.mxu0 0.0
      %529 = vmatpush1.msra.mxu0 0.0
      %530 = vmatprep.subr.mxu0 0.0
      %531 = vmatpush1.msra.mxu0 0.0
      %532 = vmatprep.subr.mxu0 0.0
      %533 = vmatpush1.msra.mxu0 0.0
      %534 = vmatprep.subr.mxu0 0.0
      %535 = vmatpush1.msra.mxu0 0.0
      %536 = vmatprep.subr.mxu0 0.0
      %537 = vmatpush1.msra.mxu0 0.0
      %538 = vmatprep.subr.mxu0 0.0
      %539 = vmatpush1.msra.mxu0 0.0
      %540 = vmatprep.subr.mxu0 0.0
      %541 = vmatpush1.msra.mxu0 0.0
      %542 = vmatprep.subr.mxu0 0.0
      %543 = vmatpush1.msra.mxu0 0.0
      %544 = vmatprep.subr.mxu0 0.0
      %545 = vmatpush1.msra.mxu0 0.0
      %546 = vmatprep.subr.mxu0 0.0
      %547 = vmatpush1.msra.mxu0 0.0
      %548 = vmatprep.subr.mxu0 0.0
      %549 = vmatpush1.msra.mxu0 0.0
      %550 = vmatprep.subr.mxu0 0.0
      %551 = vmatpush1.msra.mxu0 0.0
      %552 = vmatprep.subr.mxu0 0.0
      %553 = vmatpush1.msra.mxu0 0.0
      %554 = vmatprep.subr.mxu0 0.0
      %555 = vmatpush1.msra.mxu0 0.0
      %556 = vmatprep.subr.mxu0 0.0
      %557 = vmatpush1.msra.mxu0 0.0
      %558 = vmatprep.subr.mxu0 0.0
      %559 = vmatpush1.msra.mxu0 0.0
      %560 = vmatprep.subr.mxu0 0.0
      %561 = vmatpush1.msra.mxu0 0.0
      %562 = vmatprep.subr.mxu0 0.0
      %563 = vmatpush1.msra.mxu0 0.0
      %564 = vmatprep.subr.mxu0 0.0
      %565 = vmatpush1.msra.mxu0 0.0
      %566 = vmatprep.subr.mxu0 0.0
      %567 = vmatpush1.msra.mxu0 0.0
      %568 = vmatprep.subr.mxu0 0.0
      %569 = vmatpush1.msra.mxu0 0.0
      %570 = vmatprep.subr.mxu0 0.0
      %571 = vmatpush1.msra.mxu0 0.0
      %572 = vmatprep.subr.mxu0 0.0
      %573 = vmatpush1.msra.mxu0 0.0
      %574 = vmatprep.subr.mxu0 0.0
      %575 = vmatpush1.msra.mxu0 0.0
      %576 = vmatprep.subr.mxu0 0.0
      %577 = vmatpush1.msra.mxu0 0.0
      %578 = vmatprep.subr.mxu0 0.0
      %579 = vmatpush1.msra.mxu0 0.0
      %580 = vmatprep.subr.mxu0 0.0
      %581 = vmatpush1.msra.mxu0 0.0
      %582 = vmatprep.subr.mxu0 0.0
      %583 = vmatpush1.msra.mxu0 0.0
      %584 = vmatprep.subr.mxu0 0.0
      %585 = vmatpush1.msra.mxu0 0.0
      %586 = vmatprep.subr.mxu0 0.0
      %587 = vmatpush1.msra.mxu0 0.0
      %588 = vmatprep.subr.mxu0 0.0
      %589 = vmatpush1.msra.mxu0 0.0
      %590 = vmatprep.mubr.f32.mxu0 0.0
      %591 = vmatmul.mubr.f32.gmra.mrb[0].mxu0 %v520
      %v592 = vpop.f32.mrb[0].mxu0
      %v593 = vadd.f32 0.0, %v592
      %v594 = vpop.f32.mrb[0].mxu0
      %v595 = vadd.f32 0.0, %v594
      %596 = vdwg.mxu0
      %v597 = vadd.f32 %v259, %v593
      %v598 = vadd.f32 %v259, %v595
      %v599 = vld [vmem:[%s212 + $0x18] sm:$0xff]
      %v601 = vcombine.high %v599, %v599
      %v603 = vsel %vm264, %v251, 0
      %v605 = vsel %vm268, %v599, 0
      %v607 = vsel %vm268, %v601, 0
      %609 = vmatprep.subr.mxu0 %v607
      %610 = vmatpush1.msra.mxu0 %v605
      %611 = vmatprep.subr.mxu0 0.0
      %612 = vmatpush1.msra.mxu0 0.0
      %613 = vmatprep.subr.mxu0 0.0
      %614 = vmatpush1.msra.mxu0 0.0
      %615 = vmatprep.subr.mxu0 0.0
      %616 = vmatpush1.msra.mxu0 0.0
      %617 = vmatprep.subr.mxu0 0.0
      %618 = vmatpush1.msra.mxu0 0.0
      %619 = vmatprep.subr.mxu0 0.0
      %620 = vmatpush1.msra.mxu0 0.0
      %621 = vmatprep.subr.mxu0 0.0
      %622 = vmatpush1.msra.mxu0 0.0
      %623 = vmatprep.subr.mxu0 0.0
      %624 = vmatpush1.msra.mxu0 0.0
      %625 = vmatprep.subr.mxu0 0.0
      %626 = vmatpush1.msra.mxu0 0.0
      %627 = vmatprep.subr.mxu0 0.0
      %628 = vmatpush1.msra.mxu0 0.0
      %629 = vmatprep.subr.mxu0 0.0
      %630 = vmatpush1.msra.mxu0 0.0
      %631 = vmatprep.subr.mxu0 0.0
      %632 = vmatpush1.msra.mxu0 0.0
      %633 = vmatprep.subr.mxu0 0.0
      %634 = vmatpush1.msra.mxu0 0.0
      %635 = vmatprep.subr.mxu0 0.0
      %636 = vmatpush1.msra.mxu0 0.0
      %637 = vmatprep.subr.mxu0 0.0
      %638 = vmatpush1.msra.mxu0 0.0
      %639 = vmatprep.subr.mxu0 0.0
      %640 = vmatpush1.msra.mxu0 0.0
      %641 = vmatprep.subr.mxu0 0.0
      %642 = vmatpush1.msra.mxu0 0.0
      %643 = vmatprep.subr.mxu0 0.0
      %644 = vmatpush1.msra.mxu0 0.0
      %645 = vmatprep.subr.mxu0 0.0
      %646 = vmatpush1.msra.mxu0 0.0
      %647 = vmatprep.subr.mxu0 0.0
      %648 = vmatpush1.msra.mxu0 0.0
      %649 = vmatprep.subr.mxu0 0.0
      %650 = vmatpush1.msra.mxu0 0.0
      %651 = vmatprep.subr.mxu0 0.0
      %652 = vmatpush1.msra.mxu0 0.0
      %653 = vmatprep.subr.mxu0 0.0
      %654 = vmatpush1.msra.mxu0 0.0
      %655 = vmatprep.subr.mxu0 0.0
      %656 = vmatpush1.msra.mxu0 0.0
      %657 = vmatprep.subr.mxu0 0.0
      %658 = vmatpush1.msra.mxu0 0.0
      %659 = vmatprep.subr.mxu0 0.0
      %660 = vmatpush1.msra.mxu0 0.0
      %661 = vmatprep.subr.mxu0 0.0
      %662 = vmatpush1.msra.mxu0 0.0
      %663 = vmatprep.subr.mxu0 0.0
      %664 = vmatpush1.msra.mxu0 0.0
      %665 = vmatprep.subr.mxu0 0.0
      %666 = vmatpush1.msra.mxu0 0.0
      %667 = vmatprep.subr.mxu0 0.0
      %668 = vmatpush1.msra.mxu0 0.0
      %669 = vmatprep.subr.mxu0 0.0
      %670 = vmatpush1.msra.mxu0 0.0
      %671 = vmatprep.subr.mxu0 0.0
      %672 = vmatpush1.msra.mxu0 0.0
      %673 = vmatprep.mubr.f32.mxu0 0.0
      %674 = vmatmul.mubr.f32.gmra.mrb[0].mxu0 %v603
      %v675 = vpop.f32.mrb[0].mxu0
      %v676 = vadd.f32 0.0, %v675
      %v677 = vpop.f32.mrb[0].mxu0
      %v678 = vadd.f32 0.0, %v677
      %679 = vdwg.mxu0
      %v680 = vadd.f32 %v597, %v676
      %v681 = vadd.f32 %v598, %v678
      %v682 = vld [vmem:[%s212 + $0x20] sm:$0xff]
      %v684 = vcombine.high %v682, %v682
      %v685 = vsel %vm268, %v682, 0
      %v687 = vsel %vm268, %v684, 0
      %689 = vmatprep.subr.mxu0 %v687
      %690 = vmatpush1.msra.mxu0 %v685
      %691 = vmatprep.subr.mxu0 0.0
      %692 = vmatpush1.msra.mxu0 0.0
      %693 = vmatprep.subr.mxu0 0.0
      %694 = vmatpush1.msra.mxu0 0.0
      %695 = vmatprep.subr.mxu0 0.0
      %696 = vmatpush1.msra.mxu0 0.0
      %697 = vmatprep.subr.mxu0 0.0
      %698 = vmatpush1.msra.mxu0 0.0
      %699 = vmatprep.subr.mxu0 0.0
      %700 = vmatpush1.msra.mxu0 0.0
      %701 = vmatprep.subr.mxu0 0.0
      %702 = vmatpush1.msra.mxu0 0.0
      %703 = vmatprep.subr.mxu0 0.0
      %704 = vmatpush1.msra.mxu0 0.0
      %705 = vmatprep.subr.mxu0 0.0
      %706 = vmatpush1.msra.mxu0 0.0
      %707 = vmatprep.subr.mxu0 0.0
      %708 = vmatpush1.msra.mxu0 0.0
      %709 = vmatprep.subr.mxu0 0.0
      %710 = vmatpush1.msra.mxu0 0.0
      %711 = vmatprep.subr.mxu0 0.0
      %712 = vmatpush1.msra.mxu0 0.0
      %713 = vmatprep.subr.mxu0 0.0
      %714 = vmatpush1.msra.mxu0 0.0
      %715 = vmatprep.subr.mxu0 0.0
      %716 = vmatpush1.msra.mxu0 0.0
      %717 = vmatprep.subr.mxu0 0.0
      %718 = vmatpush1.msra.mxu0 0.0
      %719 = vmatprep.subr.mxu0 0.0
      %720 = vmatpush1.msra.mxu0 0.0
      %721 = vmatprep.subr.mxu0 0.0
      %722 = vmatpush1.msra.mxu0 0.0
      %723 = vmatprep.subr.mxu0 0.0
      %724 = vmatpush1.msra.mxu0 0.0
      %725 = vmatprep.subr.mxu0 0.0
      %726 = vmatpush1.msra.mxu0 0.0
      %727 = vmatprep.subr.mxu0 0.0
      %728 = vmatpush1.msra.mxu0 0.0
      %729 = vmatprep.subr.mxu0 0.0
      %730 = vmatpush1.msra.mxu0 0.0
      %731 = vmatprep.subr.mxu0 0.0
      %732 = vmatpush1.msra.mxu0 0.0
      %733 = vmatprep.subr.mxu0 0.0
      %734 = vmatpush1.msra.mxu0 0.0
      %735 = vmatprep.subr.mxu0 0.0
      %736 = vmatpush1.msra.mxu0 0.0
      %737 = vmatprep.subr.mxu0 0.0
      %738 = vmatpush1.msra.mxu0 0.0
      %739 = vmatprep.subr.mxu0 0.0
      %740 = vmatpush1.msra.mxu0 0.0
      %741 = vmatprep.subr.mxu0 0.0
      %742 = vmatpush1.msra.mxu0 0.0
      %743 = vmatprep.subr.mxu0 0.0
      %744 = vmatpush1.msra.mxu0 0.0
      %745 = vmatprep.subr.mxu0 0.0
      %746 = vmatpush1.msra.mxu0 0.0
      %747 = vmatprep.subr.mxu0 0.0
      %748 = vmatpush1.msra.mxu0 0.0
      %749 = vmatprep.subr.mxu0 0.0
      %750 = vmatpush1.msra.mxu0 0.0
      %751 = vmatprep.subr.mxu0 0.0
      %752 = vmatpush1.msra.mxu0 0.0
      %753 = vmatprep.mubr.f32.mxu0 0.0
      %754 = vmatmul.mubr.f32.gmra.mrb[0].mxu0 %v266
      %v755 = vpop.f32.mrb[0].mxu0
      %v756 = vadd.f32 0.0, %v755
      %v757 = vpop.f32.mrb[0].mxu0
      %v758 = vadd.f32 0.0, %v757
      %759 = vdwg.mxu0
      %v760 = vadd.f32 %v680, %v756
      %v761 = vadd.f32 %v681, %v758
      %v762 = vld [vmem:[%s212 + $0x28] sm:$0xff]
      %v764 = vcombine.high %v762, %v762
      %v765 = vsel %vm268, %v762, 0
      %v767 = vsel %vm268, %v764, 0
      %769 = vmatprep.subr.mxu0 %v767
      %770 = vmatpush1.msra.mxu0 %v765
      %771 = vmatprep.subr.mxu0 0.0
      %772 = vmatpush1.msra.mxu0 0.0
      %773 = vmatprep.subr.mxu0 0.0
      %774 = vmatpush1.msra.mxu0 0.0
      %775 = vmatprep.subr.mxu0 0.0
      %776 = vmatpush1.msra.mxu0 0.0
      %777 = vmatprep.subr.mxu0 0.0
      %778 = vmatpush1.msra.mxu0 0.0
      %779 = vmatprep.subr.mxu0 0.0
      %780 = vmatpush1.msra.mxu0 0.0
      %781 = vmatprep.subr.mxu0 0.0
      %782 = vmatpush1.msra.mxu0 0.0
      %783 = vmatprep.subr.mxu0 0.0
      %784 = vmatpush1.msra.mxu0 0.0
      %785 = vmatprep.subr.mxu0 0.0
      %786 = vmatpush1.msra.mxu0 0.0
      %787 = vmatprep.subr.mxu0 0.0
      %788 = vmatpush1.msra.mxu0 0.0
      %789 = vmatprep.subr.mxu0 0.0
      %790 = vmatpush1.msra.mxu0 0.0
      %791 = vmatprep.subr.mxu0 0.0
      %792 = vmatpush1.msra.mxu0 0.0
      %793 = vmatprep.subr.mxu0 0.0
      %794 = vmatpush1.msra.mxu0 0.0
      %795 = vmatprep.subr.mxu0 0.0
      %796 = vmatpush1.msra.mxu0 0.0
      %797 = vmatprep.subr.mxu0 0.0
      %798 = vmatpush1.msra.mxu0 0.0
      %799 = vmatprep.subr.mxu0 0.0
      %800 = vmatpush1.msra.mxu0 0.0
      %801 = vmatprep.subr.mxu0 0.0
      %802 = vmatpush1.msra.mxu0 0.0
      %803 = vmatprep.subr.mxu0 0.0
      %804 = vmatpush1.msra.mxu0 0.0
      %805 = vmatprep.subr.mxu0 0.0
      %806 = vmatpush1.msra.mxu0 0.0
      %807 = vmatprep.subr.mxu0 0.0
      %808 = vmatpush1.msra.mxu0 0.0
      %809 = vmatprep.subr.mxu0 0.0
      %810 = vmatpush1.msra.mxu0 0.0
      %811 = vmatprep.subr.mxu0 0.0
      %812 = vmatpush1.msra.mxu0 0.0
      %813 = vmatprep.subr.mxu0 0.0
      %814 = vmatpush1.msra.mxu0 0.0
      %815 = vmatprep.subr.mxu0 0.0
      %816 = vmatpush1.msra.mxu0 0.0
      %817 = vmatprep.subr.mxu0 0.0
      %818 = vmatpush1.msra.mxu0 0.0
      %819 = vmatprep.subr.mxu0 0.0
      %820 = vmatpush1.msra.mxu0 0.0
      %821 = vmatprep.subr.mxu0 0.0
      %822 = vmatpush1.msra.mxu0 0.0
      %823 = vmatprep.subr.mxu0 0.0
      %824 = vmatpush1.msra.mxu0 0.0
      %825 = vmatprep.subr.mxu0 0.0
      %826 = vmatpush1.msra.mxu0 0.0
      %827 = vmatprep.subr.mxu0 0.0
      %828 = vmatpush1.msra.mxu0 0.0
      %829 = vmatprep.subr.mxu0 0.0
      %830 = vmatpush1.msra.mxu0 0.0
      %831 = vmatprep.subr.mxu0 0.0
      %832 = vmatpush1.msra.mxu0 0.0
      %833 = vmatprep.mubr.f32.mxu0 0.0
      %834 = vmatmul.mubr.f32.gmra.mrb[0].mxu0 %v350
      %v835 = vpop.f32.mrb[0].mxu0
      %v836 = vadd.f32 0.0, %v835
      %v837 = vpop.f32.mrb[0].mxu0
      %v838 = vadd.f32 0.0, %v837
      %839 = vdwg.mxu0
      %v840 = vadd.f32 %v760, %v836
      %v841 = vadd.f32 %v761, %v838
      %v842 = vld [vmem:[%s212 + $0x30] sm:$0xff]
      %v844 = vcombine.high %v842, %v842
      %v845 = vsel %vm268, %v842, 0
      %v847 = vsel %vm268, %v844, 0
      %849 = vmatprep.subr.mxu0 %v847
      %850 = vmatpush1.msra.mxu0 %v845
      %851 = vmatprep.subr.mxu0 0.0
      %852 = vmatpush1.msra.mxu0 0.0
      %853 = vmatprep.subr.mxu0 0.0
      %854 = vmatpush1.msra.mxu0 0.0
      %855 = vmatprep.subr.mxu0 0.0
      %856 = vmatpush1.msra.mxu0 0.0
      %857 = vmatprep.subr.mxu0 0.0
      %858 = vmatpush1.msra.mxu0 0.0
      %859 = vmatprep.subr.mxu0 0.0
      %860 = vmatpush1.msra.mxu0 0.0
      %861 = vmatprep.subr.mxu0 0.0
      %862 = vmatpush1.msra.mxu0 0.0
      %863 = vmatprep.subr.mxu0 0.0
      %864 = vmatpush1.msra.mxu0 0.0
      %865 = vmatprep.subr.mxu0 0.0
      %866 = vmatpush1.msra.mxu0 0.0
      %867 = vmatprep.subr.mxu0 0.0
      %868 = vmatpush1.msra.mxu0 0.0
      %869 = vmatprep.subr.mxu0 0.0
      %870 = vmatpush1.msra.mxu0 0.0
      %871 = vmatprep.subr.mxu0 0.0
      %872 = vmatpush1.msra.mxu0 0.0
      %873 = vmatprep.subr.mxu0 0.0
      %874 = vmatpush1.msra.mxu0 0.0
      %875 = vmatprep.subr.mxu0 0.0
      %876 = vmatpush1.msra.mxu0 0.0
      %877 = vmatprep.subr.mxu0 0.0
      %878 = vmatpush1.msra.mxu0 0.0
      %879 = vmatprep.subr.mxu0 0.0
      %880 = vmatpush1.msra.mxu0 0.0
      %881 = vmatprep.subr.mxu0 0.0
      %882 = vmatpush1.msra.mxu0 0.0
      %883 = vmatprep.subr.mxu0 0.0
      %884 = vmatpush1.msra.mxu0 0.0
      %885 = vmatprep.subr.mxu0 0.0
      %886 = vmatpush1.msra.mxu0 0.0
      %887 = vmatprep.subr.mxu0 0.0
      %888 = vmatpush1.msra.mxu0 0.0
      %889 = vmatprep.subr.mxu0 0.0
      %890 = vmatpush1.msra.mxu0 0.0
      %891 = vmatprep.subr.mxu0 0.0
      %892 = vmatpush1.msra.mxu0 0.0
      %893 = vmatprep.subr.mxu0 0.0
      %894 = vmatpush1.msra.mxu0 0.0
      %895 = vmatprep.subr.mxu0 0.0
      %896 = vmatpush1.msra.mxu0 0.0
      %897 = vmatprep.subr.mxu0 0.0
      %898 = vmatpush1.msra.mxu0 0.0
      %899 = vmatprep.subr.mxu0 0.0
      %900 = vmatpush1.msra.mxu0 0.0
      %901 = vmatprep.subr.mxu0 0.0
      %902 = vmatpush1.msra.mxu0 0.0
      %903 = vmatprep.subr.mxu0 0.0
      %904 = vmatpush1.msra.mxu0 0.0
      %905 = vmatprep.subr.mxu0 0.0
      %906 = vmatpush1.msra.mxu0 0.0
      %907 = vmatprep.subr.mxu0 0.0
      %908 = vmatpush1.msra.mxu0 0.0
      %909 = vmatprep.subr.mxu0 0.0
      %910 = vmatpush1.msra.mxu0 0.0
      %911 = vmatprep.subr.mxu0 0.0
      %912 = vmatpush1.msra.mxu0 0.0
      %913 = vmatprep.mubr.f32.mxu0 0.0
      %914 = vmatmul.mubr.f32.gmra.mrb[0].mxu0 %v433
      %v915 = vpop.f32.mrb[0].mxu0
      %v916 = vadd.f32 0.0, %v915
      %v917 = vpop.f32.mrb[0].mxu0
      %v918 = vadd.f32 0.0, %v917
      %919 = vdwg.mxu0
      %v920 = vadd.f32 %v840, %v916
      %v921 = vadd.f32 %v841, %v918
      %v922 = vmax.f32 %v920, 0.0
      %v923 = vmax.f32 %v921, 0.0
      %924 = vst [vmem:[%s217 + $0x90] sm:$0xff] %v922
      %925 = vst [vmem:[%s217 + $0x98] sm:$0xff] %v923
      %v926 = vld [vmem:[%s212 + $0x30] sm:$0xff]
      %v928 = vcombine.high %v926, %v926
      %v929 = vsel %vm268, %v926, 0
      %v931 = vsel %vm268, %v928, 0
      %933 = vmatprep.subr.mxu0 %v931
      %934 = vmatpush1.msra.mxu0 %v929
      %935 = vmatprep.subr.mxu0 0.0
      %936 = vmatpush1.msra.mxu0 0.0
      %937 = vmatprep.subr.mxu0 0.0
      %938 = vmatpush1.msra.mxu0 0.0
      %939 = vmatprep.subr.mxu0 0.0
      %940 = vmatpush1.msra.mxu0 0.0
      %941 = vmatprep.subr.mxu0 0.0
      %942 = vmatpush1.msra.mxu0 0.0
      %943 = vmatprep.subr.mxu0 0.0
      %944 = vmatpush1.msra.mxu0 0.0
      %945 = vmatprep.subr.mxu0 0.0
      %946 = vmatpush1.msra.mxu0 0.0
      %947 = vmatprep.subr.mxu0 0.0
      %948 = vmatpush1.msra.mxu0 0.0
      %949 = vmatprep.subr.mxu0 0.0
      %950 = vmatpush1.msra.mxu0 0.0
      %951 = vmatprep.subr.mxu0 0.0
      %952 = vmatpush1.msra.mxu0 0.0
      %953 = vmatprep.subr.mxu0 0.0
      %954 = vmatpush1.msra.mxu0 0.0
      %955 = vmatprep.subr.mxu0 0.0
      %956 = vmatpush1.msra.mxu0 0.0
      %957 = vmatprep.subr.mxu0 0.0
      %958 = vmatpush1.msra.mxu0 0.0
      %959 = vmatprep.subr.mxu0 0.0
      %960 = vmatpush1.msra.mxu0 0.0
      %961 = vmatprep.subr.mxu0 0.0
      %962 = vmatpush1.msra.mxu0 0.0
      %963 = vmatprep.subr.mxu0 0.0
      %964 = vmatpush1.msra.mxu0 0.0
      %965 = vmatprep.subr.mxu0 0.0
      %966 = vmatpush1.msra.mxu0 0.0
      %967 = vmatprep.subr.mxu0 0.0
      %968 = vmatpush1.msra.mxu0 0.0
      %969 = vmatprep.subr.mxu0 0.0
      %970 = vmatpush1.msra.mxu0 0.0
      %971 = vmatprep.subr.mxu0 0.0
      %972 = vmatpush1.msra.mxu0 0.0
      %973 = vmatprep.subr.mxu0 0.0
      %974 = vmatpush1.msra.mxu0 0.0
      %975 = vmatprep.subr.mxu0 0.0
      %976 = vmatpush1.msra.mxu0 0.0
      %977 = vmatprep.subr.mxu0 0.0
      %978 = vmatpush1.msra.mxu0 0.0
      %979 = vmatprep.subr.mxu0 0.0
      %980 = vmatpush1.msra.mxu0 0.0
      %981 = vmatprep.subr.mxu0 0.0
      %982 = vmatpush1.msra.mxu0 0.0
      %983 = vmatprep.subr.mxu0 0.0
      %984 = vmatpush1.msra.mxu0 0.0
      %985 = vmatprep.subr.mxu0 0.0
      %986 = vmatpush1.msra.mxu0 0.0
      %987 = vmatprep.subr.mxu0 0.0
      %988 = vmatpush1.msra.mxu0 0.0
      %989 = vmatprep.subr.mxu0 0.0
      %990 = vmatpush1.msra.mxu0 0.0
      %991 = vmatprep.subr.mxu0 0.0
      %992 = vmatpush1.msra.mxu0 0.0
      %993 = vmatprep.subr.mxu0 0.0
      %994 = vmatpush1.msra.mxu0 0.0
      %995 = vmatprep.subr.mxu0 0.0
      %996 = vmatpush1.msra.mxu0 0.0
      %997 = vmatprep.mubr.f32.mxu0 0.0
      %998 = vmatmul.mubr.f32.gmra.mrb[0].mxu0 %v520
      %v999 = vpop.f32.mrb[0].mxu0
      %v1000 = vadd.f32 0.0, %v999
      %v1001 = vpop.f32.mrb[0].mxu0
      %v1002 = vadd.f32 0.0, %v1001
      %1003 = vdwg.mxu0
      %v1004 = vadd.f32 %v259, %v1000
      %v1005 = vadd.f32 %v259, %v1002
      %v1006 = vld [vmem:[%s212 + $0x38] sm:$0xff]
      %v1008 = vcombine.high %v1006, %v1006
      %v1009 = vsel %vm268, %v1006, 0
      %v1011 = vsel %vm268, %v1008, 0
      %1013 = vmatprep.subr.mxu0 %v1011
      %1014 = vmatpush1.msra.mxu0 %v1009
      %1015 = vmatprep.subr.mxu0 0.0
      %1016 = vmatpush1.msra.mxu0 0.0
      %1017 = vmatprep.subr.mxu0 0.0
      %1018 = vmatpush1.msra.mxu0 0.0
      %1019 = vmatprep.subr.mxu0 0.0
      %1020 = vmatpush1.msra.mxu0 0.0
      %1021 = vmatprep.subr.mxu0 0.0
      %1022 = vmatpush1.msra.mxu0 0.0
      %1023 = vmatprep.subr.mxu0 0.0
      %1024 = vmatpush1.msra.mxu0 0.0
      %1025 = vmatprep.subr.mxu0 0.0
      %1026 = vmatpush1.msra.mxu0 0.0
      %1027 = vmatprep.subr.mxu0 0.0
      %1028 = vmatpush1.msra.mxu0 0.0
      %1029 = vmatprep.subr.mxu0 0.0
      %1030 = vmatpush1.msra.mxu0 0.0
      %1031 = vmatprep.subr.mxu0 0.0
      %1032 = vmatpush1.msra.mxu0 0.0
      %1033 = vmatprep.subr.mxu0 0.0
      %1034 = vmatpush1.msra.mxu0 0.0
      %1035 = vmatprep.subr.mxu0 0.0
      %1036 = vmatpush1.msra.mxu0 0.0
      %1037 = vmatprep.subr.mxu0 0.0
      %1038 = vmatpush1.msra.mxu0 0.0
      %1039 = vmatprep.subr.mxu0 0.0
      %1040 = vmatpush1.msra.mxu0 0.0
      %1041 = vmatprep.subr.mxu0 0.0
      %1042 = vmatpush1.msra.mxu0 0.0
      %1043 = vmatprep.subr.mxu0 0.0
      %1044 = vmatpush1.msra.mxu0 0.0
      %1045 = vmatprep.subr.mxu0 0.0
      %1046 = vmatpush1.msra.mxu0 0.0
      %1047 = vmatprep.subr.mxu0 0.0
      %1048 = vmatpush1.msra.mxu0 0.0
      %1049 = vmatprep.subr.mxu0 0.0
      %1050 = vmatpush1.msra.mxu0 0.0
      %1051 = vmatprep.subr.mxu0 0.0
      %1052 = vmatpush1.msra.mxu0 0.0
      %1053 = vmatprep.subr.mxu0 0.0
      %1054 = vmatpush1.msra.mxu0 0.0
      %1055 = vmatprep.subr.mxu0 0.0
      %1056 = vmatpush1.msra.mxu0 0.0
      %1057 = vmatprep.subr.mxu0 0.0
      %1058 = vmatpush1.msra.mxu0 0.0
      %1059 = vmatprep.subr.mxu0 0.0
      %1060 = vmatpush1.msra.mxu0 0.0
      %1061 = vmatprep.subr.mxu0 0.0
      %1062 = vmatpush1.msra.mxu0 0.0
      %1063 = vmatprep.subr.mxu0 0.0
      %1064 = vmatpush1.msra.mxu0 0.0
      %1065 = vmatprep.subr.mxu0 0.0
      %1066 = vmatpush1.msra.mxu0 0.0
      %1067 = vmatprep.subr.mxu0 0.0
      %1068 = vmatpush1.msra.mxu0 0.0
      %1069 = vmatprep.subr.mxu0 0.0
      %1070 = vmatpush1.msra.mxu0 0.0
      %1071 = vmatprep.subr.mxu0 0.0
      %1072 = vmatpush1.msra.mxu0 0.0
      %1073 = vmatprep.subr.mxu0 0.0
      %1074 = vmatpush1.msra.mxu0 0.0
      %1075 = vmatprep.subr.mxu0 0.0
      %1076 = vmatpush1.msra.mxu0 0.0
      %1077 = vmatprep.mubr.f32.mxu0 0.0
      %1078 = vmatmul.mubr.f32.gmra.mrb[0].mxu0 %v603
      %v1079 = vpop.f32.mrb[0].mxu0
      %v1080 = vadd.f32 0.0, %v1079
      %v1081 = vpop.f32.mrb[0].mxu0
      %v1082 = vadd.f32 0.0, %v1081
      %1083 = vdwg.mxu0
      %v1084 = vadd.f32 %v1004, %v1080
      %v1085 = vadd.f32 %v1005, %v1082
      %v1086 = vld [vmem:[%s212 + $0x40] sm:$0xff]
      %v1088 = vcombine.high %v1086, %v1086
      %v1089 = vsel %vm268, %v1086, 0
      %v1091 = vsel %vm268, %v1088, 0
      %1093 = vmatprep.subr.mxu0 %v1091
      %1094 = vmatpush1.msra.mxu0 %v1089
      %1095 = vmatprep.subr.mxu0 0.0
      %1096 = vmatpush1.msra.mxu0 0.0
      %1097 = vmatprep.subr.mxu0 0.0
      %1098 = vmatpush1.msra.mxu0 0.0
      %1099 = vmatprep.subr.mxu0 0.0
      %1100 = vmatpush1.msra.mxu0 0.0
      %1101 = vmatprep.subr.mxu0 0.0
      %1102 = vmatpush1.msra.mxu0 0.0
      %1103 = vmatprep.subr.mxu0 0.0
      %1104 = vmatpush1.msra.mxu0 0.0
      %1105 = vmatprep.subr.mxu0 0.0
      %1106 = vmatpush1.msra.mxu0 0.0
      %1107 = vmatprep.subr.mxu0 0.0
      %1108 = vmatpush1.msra.mxu0 0.0
      %1109 = vmatprep.subr.mxu0 0.0
      %1110 = vmatpush1.msra.mxu0 0.0
      %1111 = vmatprep.subr.mxu0 0.0
      %1112 = vmatpush1.msra.mxu0 0.0
      %1113 = vmatprep.subr.mxu0 0.0
      %1114 = vmatpush1.msra.mxu0 0.0
      %1115 = vmatprep.subr.mxu0 0.0
      %1116 = vmatpush1.msra.mxu0 0.0
      %1117 = vmatprep.subr.mxu0 0.0
      %1118 = vmatpush1.msra.mxu0 0.0
      %1119 = vmatprep.subr.mxu0 0.0
      %1120 = vmatpush1.msra.mxu0 0.0
      %1121 = vmatprep.subr.mxu0 0.0
      %1122 = vmatpush1.msra.mxu0 0.0
      %1123 = vmatprep.subr.mxu0 0.0
      %1124 = vmatpush1.msra.mxu0 0.0
      %1125 = vmatprep.subr.mxu0 0.0
      %1126 = vmatpush1.msra.mxu0 0.0
      %1127 = vmatprep.subr.mxu0 0.0
      %1128 = vmatpush1.msra.mxu0 0.0
      %1129 = vmatprep.subr.mxu0 0.0
      %1130 = vmatpush1.msra.mxu0 0.0
      %1131 = vmatprep.subr.mxu0 0.0
      %1132 = vmatpush1.msra.mxu0 0.0
      %1133 = vmatprep.subr.mxu0 0.0
      %1134 = vmatpush1.msra.mxu0 0.0
      %1135 = vmatprep.subr.mxu0 0.0
      %1136 = vmatpush1.msra.mxu0 0.0
      %1137 = vmatprep.subr.mxu0 0.0
      %1138 = vmatpush1.msra.mxu0 0.0
      %1139 = vmatprep.subr.mxu0 0.0
      %1140 = vmatpush1.msra.mxu0 0.0
      %1141 = vmatprep.subr.mxu0 0.0
      %1142 = vmatpush1.msra.mxu0 0.0
      %1143 = vmatprep.subr.mxu0 0.0
      %1144 = vmatpush1.msra.mxu0 0.0
      %1145 = vmatprep.subr.mxu0 0.0
      %1146 = vmatpush1.msra.mxu0 0.0
      %1147 = vmatprep.subr.mxu0 0.0
      %1148 = vmatpush1.msra.mxu0 0.0
      %1149 = vmatprep.subr.mxu0 0.0
      %1150 = vmatpush1.msra.mxu0 0.0
      %1151 = vmatprep.subr.mxu0 0.0
      %1152 = vmatpush1.msra.mxu0 0.0
      %1153 = vmatprep.subr.mxu0 0.0
      %1154 = vmatpush1.msra.mxu0 0.0
      %1155 = vmatprep.subr.mxu0 0.0
      %1156 = vmatpush1.msra.mxu0 0.0
      %1157 = vmatprep.mubr.f32.mxu0 0.0
      %1158 = vmatmul.mubr.f32.gmra.mrb[0].mxu0 %v266
      %v1159 = vpop.f32.mrb[0].mxu0
      %v1160 = vadd.f32 0.0, %v1159
      %v1161 = vpop.f32.mrb[0].mxu0
      %v1162 = vadd.f32 0.0, %v1161
      %1163 = vdwg.mxu0
      %v1164 = vadd.f32 %v1084, %v1160
      %v1165 = vadd.f32 %v1085, %v1162
      %v1166 = vld [vmem:[%s212 + $0x48] sm:$0xff]
      %v1168 = vcombine.high %v1166, %v1166
      %v1169 = vsel %vm268, %v1166, 0
      %v1171 = vsel %vm268, %v1168, 0
      %1173 = vmatprep.subr.mxu0 %v1171
      %1174 = vmatpush1.msra.mxu0 %v1169
      %1175 = vmatprep.subr.mxu0 0.0
      %1176 = vmatpush1.msra.mxu0 0.0
      %1177 = vmatprep.subr.mxu0 0.0
      %1178 = vmatpush1.msra.mxu0 0.0
      %1179 = vmatprep.subr.mxu0 0.0
      %1180 = vmatpush1.msra.mxu0 0.0
      %1181 = vmatprep.subr.mxu0 0.0
      %1182 = vmatpush1.msra.mxu0 0.0
      %1183 = vmatprep.subr.mxu0 0.0
      %1184 = vmatpush1.msra.mxu0 0.0
      %1185 = vmatprep.subr.mxu0 0.0
      %1186 = vmatpush1.msra.mxu0 0.0
      %1187 = vmatprep.subr.mxu0 0.0
      %1188 = vmatpush1.msra.mxu0 0.0
      %1189 = vmatprep.subr.mxu0 0.0
      %1190 = vmatpush1.msra.mxu0 0.0
      %1191 = vmatprep.subr.mxu0 0.0
      %1192 = vmatpush1.msra.mxu0 0.0
      %1193 = vmatprep.subr.mxu0 0.0
      %1194 = vmatpush1.msra.mxu0 0.0
      %1195 = vmatprep.subr.mxu0 0.0
      %1196 = vmatpush1.msra.mxu0 0.0
      %1197 = vmatprep.subr.mxu0 0.0
      %1198 = vmatpush1.msra.mxu0 0.0
      %1199 = vmatprep.subr.mxu0 0.0
      %1200 = vmatpush1.msra.mxu0 0.0
      %1201 = vmatprep.subr.mxu0 0.0
      %1202 = vmatpush1.msra.mxu0 0.0
      %1203 = vmatprep.subr.mxu0 0.0
      %1204 = vmatpush1.msra.mxu0 0.0
      %1205 = vmatprep.subr.mxu0 0.0
      %1206 = vmatpush1.msra.mxu0 0.0
      %1207 = vmatprep.subr.mxu0 0.0
      %1208 = vmatpush1.msra.mxu0 0.0
      %1209 = vmatprep.subr.mxu0 0.0
      %1210 = vmatpush1.msra.mxu0 0.0
      %1211 = vmatprep.subr.mxu0 0.0
      %1212 = vmatpush1.msra.mxu0 0.0
      %1213 = vmatprep.subr.mxu0 0.0
      %1214 = vmatpush1.msra.mxu0 0.0
      %1215 = vmatprep.subr.mxu0 0.0
      %1216 = vmatpush1.msra.mxu0 0.0
      %1217 = vmatprep.subr.mxu0 0.0
      %1218 = vmatpush1.msra.mxu0 0.0
      %1219 = vmatprep.subr.mxu0 0.0
      %1220 = vmatpush1.msra.mxu0 0.0
      %1221 = vmatprep.subr.mxu0 0.0
      %1222 = vmatpush1.msra.mxu0 0.0
      %1223 = vmatprep.subr.mxu0 0.0
      %1224 = vmatpush1.msra.mxu0 0.0
      %1225 = vmatprep.subr.mxu0 0.0
      %1226 = vmatpush1.msra.mxu0 0.0
      %1227 = vmatprep.subr.mxu0 0.0
      %1228 = vmatpush1.msra.mxu0 0.0
      %1229 = vmatprep.subr.mxu0 0.0
      %1230 = vmatpush1.msra.mxu0 0.0
      %1231 = vmatprep.subr.mxu0 0.0
      %1232 = vmatpush1.msra.mxu0 0.0
      %1233 = vmatprep.subr.mxu0 0.0
      %1234 = vmatpush1.msra.mxu0 0.0
      %1235 = vmatprep.subr.mxu0 0.0
      %1236 = vmatpush1.msra.mxu0 0.0
      %1237 = vmatprep.mubr.f32.mxu0 0.0
      %1238 = vmatmul.mubr.f32.gmra.mrb[0].mxu0 %v350
      %v1239 = vpop.f32.mrb[0].mxu0
      %v1240 = vadd.f32 0.0, %v1239
      %v1241 = vpop.f32.mrb[0].mxu0
      %v1242 = vadd.f32 0.0, %v1241
      %1243 = vdwg.mxu0
      %v1244 = vadd.f32 %v1164, %v1240
      %v1245 = vadd.f32 %v1165, %v1242
      %v1246 = vld [vmem:[%s212 + $0x50] sm:$0xff]
      %v1248 = vcombine.high %v1246, %v1246
      %v1249 = vsel %vm268, %v1246, 0
      %v1251 = vsel %vm268, %v1248, 0
      %1253 = vmatprep.subr.mxu0 %v1251
      %1254 = vmatpush1.msra.mxu0 %v1249
      %1255 = vmatprep.subr.mxu0 0.0
      %1256 = vmatpush1.msra.mxu0 0.0
      %1257 = vmatprep.subr.mxu0 0.0
      %1258 = vmatpush1.msra.mxu0 0.0
      %1259 = vmatprep.subr.mxu0 0.0
      %1260 = vmatpush1.msra.mxu0 0.0
      %1261 = vmatprep.subr.mxu0 0.0
      %1262 = vmatpush1.msra.mxu0 0.0
      %1263 = vmatprep.subr.mxu0 0.0
      %1264 = vmatpush1.msra.mxu0 0.0
      %1265 = vmatprep.subr.mxu0 0.0
      %1266 = vmatpush1.msra.mxu0 0.0
      %1267 = vmatprep.subr.mxu0 0.0
      %1268 = vmatpush1.msra.mxu0 0.0
      %1269 = vmatprep.subr.mxu0 0.0
      %1270 = vmatpush1.msra.mxu0 0.0
      %1271 = vmatprep.subr.mxu0 0.0
      %1272 = vmatpush1.msra.mxu0 0.0
      %1273 = vmatprep.subr.mxu0 0.0
      %1274 = vmatpush1.msra.mxu0 0.0
      %1275 = vmatprep.subr.mxu0 0.0
      %1276 = vmatpush1.msra.mxu0 0.0
      %1277 = vmatprep.subr.mxu0 0.0
      %1278 = vmatpush1.msra.mxu0 0.0
      %1279 = vmatprep.subr.mxu0 0.0
      %1280 = vmatpush1.msra.mxu0 0.0
      %1281 = vmatprep.subr.mxu0 0.0
      %1282 = vmatpush1.msra.mxu0 0.0
      %1283 = vmatprep.subr.mxu0 0.0
      %1284 = vmatpush1.msra.mxu0 0.0
      %1285 = vmatprep.subr.mxu0 0.0
      %1286 = vmatpush1.msra.mxu0 0.0
      %1287 = vmatprep.subr.mxu0 0.0
      %1288 = vmatpush1.msra.mxu0 0.0
      %1289 = vmatprep.subr.mxu0 0.0
      %1290 = vmatpush1.msra.mxu0 0.0
      %1291 = vmatprep.subr.mxu0 0.0
      %1292 = vmatpush1.msra.mxu0 0.0
      %1293 = vmatprep.subr.mxu0 0.0
      %1294 = vmatpush1.msra.mxu0 0.0
      %1295 = vmatprep.subr.mxu0 0.0
      %1296 = vmatpush1.msra.mxu0 0.0
      %1297 = vmatprep.subr.mxu0 0.0
      %1298 = vmatpush1.msra.mxu0 0.0
      %1299 = vmatprep.subr.mxu0 0.0
      %1300 = vmatpush1.msra.mxu0 0.0
      %1301 = vmatprep.subr.mxu0 0.0
      %1302 = vmatpush1.msra.mxu0 0.0
      %1303 = vmatprep.subr.mxu0 0.0
      %1304 = vmatpush1.msra.mxu0 0.0
      %1305 = vmatprep.subr.mxu0 0.0
      %1306 = vmatpush1.msra.mxu0 0.0
      %1307 = vmatprep.subr.mxu0 0.0
      %1308 = vmatpush1.msra.mxu0 0.0
      %1309 = vmatprep.subr.mxu0 0.0
      %1310 = vmatpush1.msra.mxu0 0.0
      %1311 = vmatprep.subr.mxu0 0.0
      %1312 = vmatpush1.msra.mxu0 0.0
      %1313 = vmatprep.subr.mxu0 0.0
      %1314 = vmatpush1.msra.mxu0 0.0
      %1315 = vmatprep.subr.mxu0 0.0
      %1316 = vmatpush1.msra.mxu0 0.0
      %1317 = vmatprep.mubr.f32.mxu0 0.0
      %1318 = vmatmul.mubr.f32.gmra.mrb[0].mxu0 %v433
      %v1319 = vpop.f32.mrb[0].mxu0
      %v1320 = vadd.f32 0.0, %v1319
      %v1321 = vpop.f32.mrb[0].mxu0
      %v1322 = vadd.f32 0.0, %v1321
      %1323 = vdwg.mxu0
      %v1324 = vadd.f32 %v1244, %v1320
      %v1325 = vadd.f32 %v1245, %v1322
      %v1326 = vmax.f32 %v1324, 0.0
      %v1327 = vmax.f32 %v1325, 0.0
      %1328 = vst [vmem:[%s217 + $0xa0] sm:$0xff] %v1326
      %1329 = vst [vmem:[%s217 + $0xa8] sm:$0xff] %v1327
      %v1330 = vld [vmem:[%s212 + $0x50] sm:$0xff]
      %v1332 = vcombine.high %v1330, %v1330
      %v1333 = vsel %vm268, %v1330, 0
      %v1335 = vsel %vm268, %v1332, 0
      %1337 = vmatprep.subr.mxu0 %v1335
      %1338 = vmatpush1.msra.mxu0 %v1333
      %1339 = vmatprep.subr.mxu0 0.0
      %1340 = vmatpush1.msra.mxu0 0.0
      %1341 = vmatprep.subr.mxu0 0.0
      %1342 = vmatpush1.msra.mxu0 0.0
      %1343 = vmatprep.subr.mxu0 0.0
      %1344 = vmatpush1.msra.mxu0 0.0
      %1345 = vmatprep.subr.mxu0 0.0
      %1346 = vmatpush1.msra.mxu0 0.0
      %1347 = vmatprep.subr.mxu0 0.0
      %1348 = vmatpush1.msra.mxu0 0.0
      %1349 = vmatprep.subr.mxu0 0.0
      %1350 = vmatpush1.msra.mxu0 0.0
      %1351 = vmatprep.subr.mxu0 0.0
      %1352 = vmatpush1.msra.mxu0 0.0
      %1353 = vmatprep.subr.mxu0 0.0
      %1354 = vmatpush1.msra.mxu0 0.0
      %1355 = vmatprep.subr.mxu0 0.0
      %1356 = vmatpush1.msra.mxu0 0.0
      %1357 = vmatprep.subr.mxu0 0.0
      %1358 = vmatpush1.msra.mxu0 0.0
      %1359 = vmatprep.subr.mxu0 0.0
      %1360 = vmatpush1.msra.mxu0 0.0
      %1361 = vmatprep.subr.mxu0 0.0
      %1362 = vmatpush1.msra.mxu0 0.0
      %1363 = vmatprep.subr.mxu0 0.0
      %1364 = vmatpush1.msra.mxu0 0.0
      %1365 = vmatprep.subr.mxu0 0.0
      %1366 = vmatpush1.msra.mxu0 0.0
      %1367 = vmatprep.subr.mxu0 0.0
      %1368 = vmatpush1.msra.mxu0 0.0
      %1369 = vmatprep.subr.mxu0 0.0
      %1370 = vmatpush1.msra.mxu0 0.0
      %1371 = vmatprep.subr.mxu0 0.0
      %1372 = vmatpush1.msra.mxu0 0.0
      %1373 = vmatprep.subr.mxu0 0.0
      %1374 = vmatpush1.msra.mxu0 0.0
      %1375 = vmatprep.subr.mxu0 0.0
      %1376 = vmatpush1.msra.mxu0 0.0
      %1377 = vmatprep.subr.mxu0 0.0
      %1378 = vmatpush1.msra.mxu0 0.0
      %1379 = vmatprep.subr.mxu0 0.0
      %1380 = vmatpush1.msra.mxu0 0.0
      %1381 = vmatprep.subr.mxu0 0.0
      %1382 = vmatpush1.msra.mxu0 0.0
      %1383 = vmatprep.subr.mxu0 0.0
      %1384 = vmatpush1.msra.mxu0 0.0
      %1385 = vmatprep.subr.mxu0 0.0
      %1386 = vmatpush1.msra.mxu0 0.0
      %1387 = vmatprep.subr.mxu0 0.0
      %1388 = vmatpush1.msra.mxu0 0.0
      %1389 = vmatprep.subr.mxu0 0.0
      %1390 = vmatpush1.msra.mxu0 0.0
      %1391 = vmatprep.subr.mxu0 0.0
      %1392 = vmatpush1.msra.mxu0 0.0
      %1393 = vmatprep.subr.mxu0 0.0
      %1394 = vmatpush1.msra.mxu0 0.0
      %1395 = vmatprep.subr.mxu0 0.0
      %1396 = vmatpush1.msra.mxu0 0.0
      %1397 = vmatprep.subr.mxu0 0.0
      %1398 = vmatpush1.msra.mxu0 0.0
      %1399 = vmatprep.subr.mxu0 0.0
      %1400 = vmatpush1.msra.mxu0 0.0
      %1401 = vmatprep.mubr.f32.mxu0 0.0
      %1402 = vmatmul.mubr.f32.gmra.mrb[0].mxu0 %v520
      %v1403 = vpop.f32.mrb[0].mxu0
      %v1404 = vadd.f32 0.0, %v1403
      %v1405 = vpop.f32.mrb[0].mxu0
      %v1406 = vadd.f32 0.0, %v1405
      %1407 = vdwg.mxu0
      %v1408 = vadd.f32 %v259, %v1404
      %v1409 = vadd.f32 %v259, %v1406
      %v1410 = vld [vmem:[%s212 + $0x58] sm:$0xff]
      %v1412 = vcombine.high %v1410, %v1410
      %v1413 = vsel %vm268, %v1410, 0
      %v1415 = vsel %vm268, %v1412, 0
      %1417 = vmatprep.subr.mxu0 %v1415
      %1418 = vmatpush1.msra.mxu0 %v1413
      %1419 = vmatprep.subr.mxu0 0.0
      %1420 = vmatpush1.msra.mxu0 0.0
      %1421 = vmatprep.subr.mxu0 0.0
      %1422 = vmatpush1.msra.mxu0 0.0
      %1423 = vmatprep.subr.mxu0 0.0
      %1424 = vmatpush1.msra.mxu0 0.0
      %1425 = vmatprep.subr.mxu0 0.0
      %1426 = vmatpush1.msra.mxu0 0.0
      %1427 = vmatprep.subr.mxu0 0.0
      %1428 = vmatpush1.msra.mxu0 0.0
      %1429 = vmatprep.subr.mxu0 0.0
      %1430 = vmatpush1.msra.mxu0 0.0
      %1431 = vmatprep.subr.mxu0 0.0
      %1432 = vmatpush1.msra.mxu0 0.0
      %1433 = vmatprep.subr.mxu0 0.0
      %1434 = vmatpush1.msra.mxu0 0.0
      %1435 = vmatprep.subr.mxu0 0.0
      %1436 = vmatpush1.msra.mxu0 0.0
      %1437 = vmatprep.subr.mxu0 0.0
      %1438 = vmatpush1.msra.mxu0 0.0
      %1439 = vmatprep.subr.mxu0 0.0
      %1440 = vmatpush1.msra.mxu0 0.0
      %1441 = vmatprep.subr.mxu0 0.0
      %1442 = vmatpush1.msra.mxu0 0.0
      %1443 = vmatprep.subr.mxu0 0.0
      %1444 = vmatpush1.msra.mxu0 0.0
      %1445 = vmatprep.subr.mxu0 0.0
      %1446 = vmatpush1.msra.mxu0 0.0
      %1447 = vmatprep.subr.mxu0 0.0
      %1448 = vmatpush1.msra.mxu0 0.0
      %1449 = vmatprep.subr.mxu0 0.0
      %1450 = vmatpush1.msra.mxu0 0.0
      %1451 = vmatprep.subr.mxu0 0.0
      %1452 = vmatpush1.msra.mxu0 0.0
      %1453 = vmatprep.subr.mxu0 0.0
      %1454 = vmatpush1.msra.mxu0 0.0
      %1455 = vmatprep.subr.mxu0 0.0
      %1456 = vmatpush1.msra.mxu0 0.0
      %1457 = vmatprep.subr.mxu0 0.0
      %1458 = vmatpush1.msra.mxu0 0.0
      %1459 = vmatprep.subr.mxu0 0.0
      %1460 = vmatpush1.msra.mxu0 0.0
      %1461 = vmatprep.subr.mxu0 0.0
      %1462 = vmatpush1.msra.mxu0 0.0
      %1463 = vmatprep.subr.mxu0 0.0
      %1464 = vmatpush1.msra.mxu0 0.0
      %1465 = vmatprep.subr.mxu0 0.0
      %1466 = vmatpush1.msra.mxu0 0.0
      %1467 = vmatprep.subr.mxu0 0.0
      %1468 = vmatpush1.msra.mxu0 0.0
      %1469 = vmatprep.subr.mxu0 0.0
      %1470 = vmatpush1.msra.mxu0 0.0
      %1471 = vmatprep.subr.mxu0 0.0
      %1472 = vmatpush1.msra.mxu0 0.0
      %1473 = vmatprep.subr.mxu0 0.0
      %1474 = vmatpush1.msra.mxu0 0.0
      %1475 = vmatprep.subr.mxu0 0.0
      %1476 = vmatpush1.msra.mxu0 0.0
      %1477 = vmatprep.subr.mxu0 0.0
      %1478 = vmatpush1.msra.mxu0 0.0
      %1479 = vmatprep.subr.mxu0 0.0
      %1480 = vmatpush1.msra.mxu0 0.0
      %1481 = vmatprep.mubr.f32.mxu0 0.0
      %1482 = vmatmul.mubr.f32.gmra.mrb[0].mxu0 %v603
      %v1483 = vpop.f32.mrb[0].mxu0
      %v1484 = vadd.f32 0.0, %v1483
      %v1485 = vpop.f32.mrb[0].mxu0
      %v1486 = vadd.f32 0.0, %v1485
      %1487 = vdwg.mxu0
      %v1488 = vadd.f32 %v1408, %v1484
      %v1489 = vadd.f32 %v1409, %v1486
      %v1490 = vld [vmem:[%s212 + $0x60] sm:$0xff]
      %v1492 = vcombine.high %v1490, %v1490
      %v1493 = vsel %vm268, %v1490, 0
      %v1495 = vsel %vm268, %v1492, 0
      %1497 = vmatprep.subr.mxu0 %v1495
      %1498 = vmatpush1.msra.mxu0 %v1493
      %1499 = vmatprep.subr.mxu0 0.0
      %1500 = vmatpush1.msra.mxu0 0.0
      %1501 = vmatprep.subr.mxu0 0.0
      %1502 = vmatpush1.msra.mxu0 0.0
      %1503 = vmatprep.subr.mxu0 0.0
      %1504 = vmatpush1.msra.mxu0 0.0
      %1505 = vmatprep.subr.mxu0 0.0
      %1506 = vmatpush1.msra.mxu0 0.0
      %1507 = vmatprep.subr.mxu0 0.0
      %1508 = vmatpush1.msra.mxu0 0.0
      %1509 = vmatprep.subr.mxu0 0.0
      %1510 = vmatpush1.msra.mxu0 0.0
      %1511 = vmatprep.subr.mxu0 0.0
      %1512 = vmatpush1.msra.mxu0 0.0
      %1513 = vmatprep.subr.mxu0 0.0
      %1514 = vmatpush1.msra.mxu0 0.0
      %1515 = vmatprep.subr.mxu0 0.0
      %1516 = vmatpush1.msra.mxu0 0.0
      %1517 = vmatprep.subr.mxu0 0.0
      %1518 = vmatpush1.msra.mxu0 0.0
      %1519 = vmatprep.subr.mxu0 0.0
      %1520 = vmatpush1.msra.mxu0 0.0
      %1521 = vmatprep.subr.mxu0 0.0
      %1522 = vmatpush1.msra.mxu0 0.0
      %1523 = vmatprep.subr.mxu0 0.0
      %1524 = vmatpush1.msra.mxu0 0.0
      %1525 = vmatprep.subr.mxu0 0.0
      %1526 = vmatpush1.msra.mxu0 0.0
      %1527 = vmatprep.subr.mxu0 0.0
      %1528 = vmatpush1.msra.mxu0 0.0
      %1529 = vmatprep.subr.mxu0 0.0
      %1530 = vmatpush1.msra.mxu0 0.0
      %1531 = vmatprep.subr.mxu0 0.0
      %1532 = vmatpush1.msra.mxu0 0.0
      %1533 = vmatprep.subr.mxu0 0.0
      %1534 = vmatpush1.msra.mxu0 0.0
      %1535 = vmatprep.subr.mxu0 0.0
      %1536 = vmatpush1.msra.mxu0 0.0
      %1537 = vmatprep.subr.mxu0 0.0
      %1538 = vmatpush1.msra.mxu0 0.0
      %1539 = vmatprep.subr.mxu0 0.0
      %1540 = vmatpush1.msra.mxu0 0.0
      %1541 = vmatprep.subr.mxu0 0.0
      %1542 = vmatpush1.msra.mxu0 0.0
      %1543 = vmatprep.subr.mxu0 0.0
      %1544 = vmatpush1.msra.mxu0 0.0
      %1545 = vmatprep.subr.mxu0 0.0
      %1546 = vmatpush1.msra.mxu0 0.0
      %1547 = vmatprep.subr.mxu0 0.0
      %1548 = vmatpush1.msra.mxu0 0.0
      %1549 = vmatprep.subr.mxu0 0.0
      %1550 = vmatpush1.msra.mxu0 0.0
      %1551 = vmatprep.subr.mxu0 0.0
      %1552 = vmatpush1.msra.mxu0 0.0
      %1553 = vmatprep.subr.mxu0 0.0
      %1554 = vmatpush1.msra.mxu0 0.0
      %1555 = vmatprep.subr.mxu0 0.0
      %1556 = vmatpush1.msra.mxu0 0.0
      %1557 = vmatprep.subr.mxu0 0.0
      %1558 = vmatpush1.msra.mxu0 0.0
      %1559 = vmatprep.subr.mxu0 0.0
      %1560 = vmatpush1.msra.mxu0 0.0
      %1561 = vmatprep.mubr.f32.mxu0 0.0
      %1562 = vmatmul.mubr.f32.gmra.mrb[0].mxu0 %v266
      %v1563 = vpop.f32.mrb[0].mxu0
      %v1564 = vadd.f32 0.0, %v1563
      %v1565 = vpop.f32.mrb[0].mxu0
      %v1566 = vadd.f32 0.0, %v1565
      %1567 = vdwg.mxu0
      %v1568 = vadd.f32 %v1488, %v1564
      %v1569 = vadd.f32 %v1489, %v1566
      %v1570 = vld [vmem:[%s212 + $0x68] sm:$0xff]
      %v1572 = vcombine.high %v1570, %v1570
      %v1573 = vsel %vm268, %v1570, 0
      %v1575 = vsel %vm268, %v1572, 0
      %1577 = vmatprep.subr.mxu0 %v1575
      %1578 = vmatpush1.msra.mxu0 %v1573
      %1579 = vmatprep.subr.mxu0 0.0
      %1580 = vmatpush1.msra.mxu0 0.0
      %1581 = vmatprep.subr.mxu0 0.0
      %1582 = vmatpush1.msra.mxu0 0.0
      %1583 = vmatprep.subr.mxu0 0.0
      %1584 = vmatpush1.msra.mxu0 0.0
      %1585 = vmatprep.subr.mxu0 0.0
      %1586 = vmatpush1.msra.mxu0 0.0
      %1587 = vmatprep.subr.mxu0 0.0
      %1588 = vmatpush1.msra.mxu0 0.0
      %1589 = vmatprep.subr.mxu0 0.0
      %1590 = vmatpush1.msra.mxu0 0.0
      %1591 = vmatprep.subr.mxu0 0.0
      %1592 = vmatpush1.msra.mxu0 0.0
      %1593 = vmatprep.subr.mxu0 0.0
      %1594 = vmatpush1.msra.mxu0 0.0
      %1595 = vmatprep.subr.mxu0 0.0
      %1596 = vmatpush1.msra.mxu0 0.0
      %1597 = vmatprep.subr.mxu0 0.0
      %1598 = vmatpush1.msra.mxu0 0.0
      %1599 = vmatprep.subr.mxu0 0.0
      %1600 = vmatpush1.msra.mxu0 0.0
      %1601 = vmatprep.subr.mxu0 0.0
      %1602 = vmatpush1.msra.mxu0 0.0
      %1603 = vmatprep.subr.mxu0 0.0
      %1604 = vmatpush1.msra.mxu0 0.0
      %1605 = vmatprep.subr.mxu0 0.0
      %1606 = vmatpush1.msra.mxu0 0.0
      %1607 = vmatprep.subr.mxu0 0.0
      %1608 = vmatpush1.msra.mxu0 0.0
      %1609 = vmatprep.subr.mxu0 0.0
      %1610 = vmatpush1.msra.mxu0 0.0
      %1611 = vmatprep.subr.mxu0 0.0
      %1612 = vmatpush1.msra.mxu0 0.0
      %1613 = vmatprep.subr.mxu0 0.0
      %1614 = vmatpush1.msra.mxu0 0.0
      %1615 = vmatprep.subr.mxu0 0.0
      %1616 = vmatpush1.msra.mxu0 0.0
      %1617 = vmatprep.subr.mxu0 0.0
      %1618 = vmatpush1.msra.mxu0 0.0
      %1619 = vmatprep.subr.mxu0 0.0
      %1620 = vmatpush1.msra.mxu0 0.0
      %1621 = vmatprep.subr.mxu0 0.0
      %1622 = vmatpush1.msra.mxu0 0.0
      %1623 = vmatprep.subr.mxu0 0.0
      %1624 = vmatpush1.msra.mxu0 0.0
      %1625 = vmatprep.subr.mxu0 0.0
      %1626 = vmatpush1.msra.mxu0 0.0
      %1627 = vmatprep.subr.mxu0 0.0
      %1628 = vmatpush1.msra.mxu0 0.0
      %1629 = vmatprep.subr.mxu0 0.0
      %1630 = vmatpush1.msra.mxu0 0.0
      %1631 = vmatprep.subr.mxu0 0.0
      %1632 = vmatpush1.msra.mxu0 0.0
      %1633 = vmatprep.subr.mxu0 0.0
      %1634 = vmatpush1.msra.mxu0 0.0
      %1635 = vmatprep.subr.mxu0 0.0
      %1636 = vmatpush1.msra.mxu0 0.0
      %1637 = vmatprep.subr.mxu0 0.0
      %1638 = vmatpush1.msra.mxu0 0.0
      %1639 = vmatprep.subr.mxu0 0.0
      %1640 = vmatpush1.msra.mxu0 0.0
      %1641 = vmatprep.mubr.f32.mxu0 0.0
      %1642 = vmatmul.mubr.f32.gmra.mrb[0].mxu0 %v350
      %v1643 = vpop.f32.mrb[0].mxu0
      %v1644 = vadd.f32 0.0, %v1643
      %v1645 = vpop.f32.mrb[0].mxu0
      %v1646 = vadd.f32 0.0, %v1645
      %1647 = vdwg.mxu0
      %v1648 = vadd.f32 %v1568, %v1644
      %v1649 = vadd.f32 %v1569, %v1646
      %v1650 = vld [vmem:[%s212 + $0x70] sm:$0xff]
      %v1652 = vcombine.high %v1650, %v1650
      %v1653 = vsel %vm268, %v1650, 0
      %v1655 = vsel %vm268, %v1652, 0
      %1657 = vmatprep.subr.mxu0 %v1655
      %1658 = vmatpush1.msra.mxu0 %v1653
      %1659 = vmatprep.subr.mxu0 0.0
      %1660 = vmatpush1.msra.mxu0 0.0
      %1661 = vmatprep.subr.mxu0 0.0
      %1662 = vmatpush1.msra.mxu0 0.0
      %1663 = vmatprep.subr.mxu0 0.0
      %1664 = vmatpush1.msra.mxu0 0.0
      %1665 = vmatprep.subr.mxu0 0.0
      %1666 = vmatpush1.msra.mxu0 0.0
      %1667 = vmatprep.subr.mxu0 0.0
      %1668 = vmatpush1.msra.mxu0 0.0
      %1669 = vmatprep.subr.mxu0 0.0
      %1670 = vmatpush1.msra.mxu0 0.0
      %1671 = vmatprep.subr.mxu0 0.0
      %1672 = vmatpush1.msra.mxu0 0.0
      %1673 = vmatprep.subr.mxu0 0.0
      %1674 = vmatpush1.msra.mxu0 0.0
      %1675 = vmatprep.subr.mxu0 0.0
      %1676 = vmatpush1.msra.mxu0 0.0
      %1677 = vmatprep.subr.mxu0 0.0
      %1678 = vmatpush1.msra.mxu0 0.0
      %1679 = vmatprep.subr.mxu0 0.0
      %1680 = vmatpush1.msra.mxu0 0.0
      %1681 = vmatprep.subr.mxu0 0.0
      %1682 = vmatpush1.msra.mxu0 0.0
      %1683 = vmatprep.subr.mxu0 0.0
      %1684 = vmatpush1.msra.mxu0 0.0
      %1685 = vmatprep.subr.mxu0 0.0
      %1686 = vmatpush1.msra.mxu0 0.0
      %1687 = vmatprep.subr.mxu0 0.0
      %1688 = vmatpush1.msra.mxu0 0.0
      %1689 = vmatprep.subr.mxu0 0.0
      %1690 = vmatpush1.msra.mxu0 0.0
      %1691 = vmatprep.subr.mxu0 0.0
      %1692 = vmatpush1.msra.mxu0 0.0
      %1693 = vmatprep.subr.mxu0 0.0
      %1694 = vmatpush1.msra.mxu0 0.0
      %1695 = vmatprep.subr.mxu0 0.0
      %1696 = vmatpush1.msra.mxu0 0.0
      %1697 = vmatprep.subr.mxu0 0.0
      %1698 = vmatpush1.msra.mxu0 0.0
      %1699 = vmatprep.subr.mxu0 0.0
      %1700 = vmatpush1.msra.mxu0 0.0
      %1701 = vmatprep.subr.mxu0 0.0
      %1702 = vmatpush1.msra.mxu0 0.0
      %1703 = vmatprep.subr.mxu0 0.0
      %1704 = vmatpush1.msra.mxu0 0.0
      %1705 = vmatprep.subr.mxu0 0.0
      %1706 = vmatpush1.msra.mxu0 0.0
      %1707 = vmatprep.subr.mxu0 0.0
      %1708 = vmatpush1.msra.mxu0 0.0
      %1709 = vmatprep.subr.mxu0 0.0
      %1710 = vmatpush1.msra.mxu0 0.0
      %1711 = vmatprep.subr.mxu0 0.0
      %1712 = vmatpush1.msra.mxu0 0.0
      %1713 = vmatprep.subr.mxu0 0.0
      %1714 = vmatpush1.msra.mxu0 0.0
      %1715 = vmatprep.subr.mxu0 0.0
      %1716 = vmatpush1.msra.mxu0 0.0
      %1717 = vmatprep.subr.mxu0 0.0
      %1718 = vmatpush1.msra.mxu0 0.0
      %1719 = vmatprep.subr.mxu0 0.0
      %1720 = vmatpush1.msra.mxu0 0.0
      %1721 = vmatprep.mubr.f32.mxu0 0.0
      %1722 = vmatmul.mubr.f32.gmra.mrb[0].mxu0 %v433
      %v1723 = vpop.f32.mrb[0].mxu0
      %v1724 = vadd.f32 0.0, %v1723
      %v1725 = vpop.f32.mrb[0].mxu0
      %v1726 = vadd.f32 0.0, %v1725
      %1727 = vdwg.mxu0
      %v1728 = vadd.f32 %v1648, %v1724
      %v1729 = vadd.f32 %v1649, %v1726
      %v1730 = vmax.f32 %v1728, 0.0
      %v1731 = vmax.f32 %v1729, 0.0
      %1732 = vst [vmem:[%s217 + $0xb0] sm:$0xff] %v1730
      %1733 = vst [vmem:[%s217 + $0xb8] sm:$0xff] %v1731
      %p1734 = scmp.lt.s32.totalorder %s15, 1
      %s1735 = scalar_select %p1734, %s15, 1
      %s1736 = smul.addr %s1735, 24
      %s1737 = smul.addr %s1736, 8
      %s1738 = scalar_lea.vmem %s4, %s1737
      // Predicated region
      $region37: #{fuse_fast_to_slow.1} parent=35 // pred_check
        %p1739 = pneg %p127
      $region38: #{fuse_fast_to_slow.1} parent=35 // pred_check_branch
        %1741 = sbr.rel (%p1739) target = $region40
      $region39: #{fuse_fast_to_slow.1} parent=35 // pred_region
        _
      $region40: #{fuse_fast_to_slow.1} parent=35 // pred_fallthru
        _
    $region36: #{fuse_fast_to_slow.1} parent=5 // pred_fallthru
      _
    %p1742 = scmp.le.s32.totalorder 2, %s10
    // Predicated region
    $region41: #{fuse_fast_to_slow.1} parent=5 // pred_check
      %p1743 = pneg %p1742
    $region42: #{fuse_fast_to_slow.1} parent=5 // pred_check_branch
      %1745 = sbr.rel (%p1743) target = $region44
    $region43: #{fuse_fast_to_slow.1} parent=5 // pred_region
      %s1746 = ssub.s32 %s10, 2
      // Predicated region
      $region45: #{fuse_fast_to_slow.1} parent=43 // pred_check
        %p1747 = pneg %p133
      $region46: #{fuse_fast_to_slow.1} parent=43 // pred_check_branch
        %1749 = sbr.rel (%p1747) target = $region48
      $region47: #{fuse_fast_to_slow.1} parent=43 // pred_region
        %p1750 = scmp.lt.s32.totalorder %s16, 1
        %s1751 = scalar_select %p1750, %s16, 1
        %s1752 = smul.addr %s1751, 24
        %s1753 = smul.addr %s1752, 8
        %s1754 = scalar_lea.vmem %s4, %s1753
      $region48: #{fuse_fast_to_slow.1} parent=43 // pred_fallthru
        _
    $region44: #{fuse_fast_to_slow.1} parent=5 // pred_fallthru
      _
  $region6: #{fuse_fast_to_slow.1} parent=0 // loop_footer
    %s14 = sadd.s32 1, %s10
  $region7: #{fuse_fast_to_slow.1} parent=0 // loop_footer_branch
    %9 = sbr.rel target = $region3
  $region8: #{fuse_fast_to_slow.1} parent=0 // loop_exit
    _

</llo_original>
